<compile_context>
chip_gen: v5e
topology: v5e:2x2
jax: 0.10.0
libtpu: 0.0.40
codegen_flags: <defaults>
</compile_context>

<pallas_src>
import jax
import jax.numpy as jnp
from jax.experimental import pallas as pl
from jax.experimental.pallas import tpu as pltpu

_SQRT2 = 1.4142135623730951
_LN_EPS = 1e-5
_MXU_DTYPE = jnp.bfloat16   # operand dtype for feed-forward MXU matmuls


# ---------------------------------------------------------------- helpers ---
def _gelu(x):
    # exact (erf-based) GELU, matching torch.nn.GELU() default
    return 0.5 * x * (1.0 + jax.lax.erf(x / _SQRT2))


def _ln(x, gamma, beta):
    mu = jnp.mean(x, axis=-1, keepdims=True)
    var = jnp.mean((x - mu) ** 2, axis=-1, keepdims=True)
    return (x - mu) * jax.lax.rsqrt(var + _LN_EPS) * gamma + beta


def _mm(a, b, dtype=_MXU_DTYPE):
    # MXU matmul with low-precision operands and f32 accumulation.
    return jnp.dot(a.astype(dtype), b.astype(dtype),
                   preferred_element_type=jnp.float32)


# ----------------------------------------------------------- fused kernel ---
def fused_forward_kernel(
        x_vis_ref, x_txt_ref,
        wv_enc_ref, bv_enc_ref, wp_ref, bp_ref,
        wt_enc_ref, bt_enc_ref, wtp_ref, btp_ref,
        wf_vis_ref, wf_txt_ref, bf_ref, ln1_g_ref, ln1_b_ref,
        wih_f_ref, wih_b_ref, whh_f_ref, whh_b_ref, b_f_ref, b_b_ref,
        ln2_g_ref, ln2_b_ref, wo_ref, bo_ref,
        o_ref):
    bv = x_vis_ref.shape[0]
    s_len = x_txt_ref.shape[0]
    hidden = wt_enc_ref.shape[1]
    hh = hidden // 2
    l_pad = wo_ref.shape[1]          # head output width, padded to 128 lanes

    # ---- visual_model (stub) + projection_layer: Linear -> GELU ------------
    vis_feat = _mm(x_vis_ref[...], wv_enc_ref[...]) + bv_enc_ref[...]
    vis_proj = _gelu(_mm(vis_feat, wp_ref[...]) + bp_ref[...])      # (B_v, vh)

    # ---- text_model (stub) + text_projection_layer: Linear -> GELU ---------
    txt_hid = _mm(x_txt_ref[...], wt_enc_ref[...]) + bt_enc_ref[...]
    txt_proj = _gelu(_mm(txt_hid, wtp_ref[...]) + btp_ref[...])     # (S, hh)

    # ---- fusion_layer on cat([vis, txt], -1): split-matmul + broadcast -----
    # cat([v, t], -1) @ Wf == v @ Wf_vis + t @ Wf_txt ; the visual row is
    # broadcast over the sequence, the text rows over the visual batch
    # (this is the `.repeat` / `.expand` of the reference forward).
    vis_part = _mm(vis_proj, wf_vis_ref[...])                       # (B_v, H)
    txt_part = _mm(txt_proj, wf_txt_ref[...])                       # (S, H)
    z = vis_part[:, None, :] + txt_part[None, :, :] + bf_ref[...]   # (B_v,S,H)
    # Linear -> LayerNorm -> GELU -> Dropout(eval: identity)
    fused = _gelu(_ln(z, ln1_g_ref[...], ln1_b_ref[...]))           # (B_v,S,H)

    # ---- BiLSTM -------------------------------------------------------------
    # Hoist the input projection out of the recurrence: batched matmuls over
    # all timesteps and both directions (gate order i,f,g,o; column layout
    # [forward gates | backward gates]); f32 on the recurrent path.
    wih_all = jnp.concatenate([wih_f_ref[...], wih_b_ref[...]], axis=1)  # (H, 8hh)
    b_all = jnp.concatenate([b_f_ref[...], b_b_ref[...]], axis=1)        # (1, 8hh)
    gates_x_b = [
        jnp.dot(fused[b], wih_all, preferred_element_type=jnp.float32) + b_all
        for b in range(bv)                                           # (S, 8hh)
    ]
    # Re-pack as per-timestep (B_v, 8hh) slabs for the batched recurrence.
    gx = [
        jnp.concatenate([gates_x_b[b][t:t + 1, :] for b in range(bv)], axis=0)
        for t in range(s_len)
    ]

    whh_f = whh_f_ref[...]
    whh_b = whh_b_ref[...]

    def lstm_cell(gates_x_t, h, c, whh):
        g = gates_x_t + jnp.dot(h, whh, preferred_element_type=jnp.float32)
        i = jax.nn.sigmoid(g[:, 0:hh])
        f = jax.nn.sigmoid(g[:, hh:2 * hh])
        gg = jnp.tanh(g[:, 2 * hh:3 * hh])
        o = jax.nn.sigmoid(g[:, 3 * hh:4 * hh])
        c_new = f * c + i * gg
        return o * jnp.tanh(c_new), c_new

    h_f = jnp.zeros((bv, hh), jnp.float32)
    c_f = jnp.zeros((bv, hh), jnp.float32)
    h_b = jnp.zeros((bv, hh), jnp.float32)
    c_b = jnp.zeros((bv, hh), jnp.float32)
    out_f = [None] * s_len
    out_b = [None] * s_len
    # Fully unrolled (S is small & static); the forward and backward
    # recurrences are independent, so the scheduler can interleave them.
    for t in range(s_len):
        h_f, c_f = lstm_cell(gx[t][:, :4 * hh], h_f, c_f, whh_f)
        out_f[t] = h_f
        tr = s_len - 1 - t
        h_b, c_b = lstm_cell(gx[tr][:, 4 * hh:], h_b, c_b, whh_b)
        out_b[tr] = h_b

    # ---- out_layer: LayerNorm -> Dropout(eval) -> Linear (lane-padded) -----
    lstm_sm = jnp.concatenate(
        [jnp.concatenate([out_f[s], out_b[s]], axis=1) for s in range(s_len)],
        axis=0)                                                      # (S*B_v, H)
    head_in = _ln(lstm_sm, ln2_g_ref[...], ln2_b_ref[...])
    logits = jnp.dot(head_in, wo_ref[...],
                     preferred_element_type=jnp.float32) + bo_ref[...]  # (S*B_v, l_pad)
    # Lane-dense, 128-aligned stores (output layout: (B_v, S*l_pad)).
    for s in range(s_len):
        o_ref[:, s * l_pad:(s + 1) * l_pad] = logits[s * bv:(s + 1) * bv, :]


# ---------------------------------------------------------------- wrapper ---
def init_params(key, *, c, hi, wi, vis_out, hidden, text_in, num_labels):
    ks = jax.random.split(key, 16)
    s = 0.05
    vh, hh = vis_out // 2, hidden // 2
    p = {
        # synthetic visual encoder
        "wv_enc": jax.random.normal(ks[0], (c * hi * wi, vis_out)) * s,
        "bv_enc": jnp.zeros((1, vis_out)),
        # projection_layer
        "wp": jax.random.normal(ks[1], (vis_out, vh)) * s,
        "bp": jax.random.normal(ks[2], (1, vh)) * s,
        # synthetic text encoder
        "wt_enc": jax.random.normal(ks[3], (text_in, hidden)) * s,
        "bt_enc": jnp.zeros((1, hidden)),
        # text_projection_layer
        "wtp": jax.random.normal(ks[4], (hidden, hh)) * s,
        "btp": jax.random.normal(ks[5], (1, hh)) * s,
        # fusion_layer (Linear split into visual / text row blocks of the
        # concatenated weight; cat order is [visual, text])
        "wf_vis": jax.random.normal(ks[6], (vh, hidden)) * s,
        "wf_txt": jax.random.normal(ks[7], (hh, hidden)) * s,
        "bf": jax.random.normal(ks[8], (1, hidden)) * s,
        "ln1_g": jnp.ones((1, hidden)),
        "ln1_b": jnp.zeros((1, hidden)),
        # bilstm (weights stored pre-transposed: (in, 4*Hh); gate order ifgo)
        "wih_f": jax.random.normal(ks[9], (hidden, 4 * hh)) * s,
        "whh_f": jax.random.normal(ks[10], (hh, 4 * hh)) * s,
        "b_f": jax.random.normal(ks[11], (1, 4 * hh)) * s,
        "wih_b": jax.random.normal(ks[12], (hidden, 4 * hh)) * s,
        "whh_b": jax.random.normal(ks[13], (hh, 4 * hh)) * s,
        "b_b": jax.random.normal(ks[14], (1, 4 * hh)) * s,
        # out_layer
        "ln2_g": jnp.ones((1, hidden)),
        "ln2_b": jnp.zeros((1, hidden)),
        "wo": jax.random.normal(ks[15], (hidden, num_labels)) * s,
        "bo": jnp.zeros((1, num_labels)),
    }
    return jax.tree.map(lambda a: a.astype(jnp.float32), p)


def forward(visual_feats, text_feats, params):
    """visual_feats: (B_v, C, H, W) NCHW; text_feats: (1, S, text_in)."""
    p = params
    bv = visual_feats.shape[0]
    s_len = text_feats.shape[1]
    num_labels = p["wo"].shape[1]
    l_pad = ((num_labels + 127) // 128) * 128       # lane-dense head width
    f32 = jnp.float32

    x_vis = visual_feats.reshape(bv, -1).astype(f32)
    x_txt = text_feats[0].astype(f32)               # text batch is 1 (repeated)

    # Zero-pad head weight/bias to a 128-lane multiple so all kernel stores
    # are unmasked and lane-dense; padded logits are zero and sliced away.
    wo_pad = jnp.pad(p["wo"], ((0, 0), (0, l_pad - num_labels)))
    bo_pad = jnp.pad(p["bo"], ((0, 0), (0, l_pad - num_labels)))

    out = pl.pallas_call(
        fused_forward_kernel,
        out_shape=jax.ShapeDtypeStruct((bv, s_len * l_pad), f32),
        compiler_params=pltpu.CompilerParams(
            vmem_limit_bytes=32 * 1024 * 1024),
    )(x_vis, x_txt,
      p["wv_enc"], p["bv_enc"], p["wp"], p["bp"],
      p["wt_enc"], p["bt_enc"], p["wtp"], p["btp"],
      p["wf_vis"], p["wf_txt"], p["bf"], p["ln1_g"], p["ln1_b"],
      p["wih_f"], p["wih_b"], p["whh_f"], p["whh_b"], p["b_f"], p["b_b"],
      p["ln2_g"], p["ln2_b"], wo_pad, bo_pad)

    return out.reshape(bv, s_len, l_pad)[:, :, :num_labels]


# -------------------------------------------- plain-JAX f32 reference -------
def forward_ref(visual_feats, text_feats, p):
    bv = visual_feats.shape[0]
    hh = p["wt_enc"].shape[1] // 2
    x_vis = visual_feats.reshape(bv, -1)
    x_txt = text_feats[0]
    vis = _gelu((x_vis @ p["wv_enc"] + p["bv_enc"]) @ p["wp"] + p["bp"])
    txt = _gelu((x_txt @ p["wt_enc"] + p["bt_enc"]) @ p["wtp"] + p["btp"])
    vis_part = vis @ p["wf_vis"]
    txt_part = txt @ p["wf_txt"]
    z = vis_part[:, None, :] + txt_part[None, :, :] + p["bf"]
    fused = _gelu(_ln(z, p["ln1_g"], p["ln1_b"]))

    def lstm_dir(x, wih, whh, b, reverse):
        seq = x[:, ::-1] if reverse else x
        h = jnp.zeros((bv, hh))
        c = jnp.zeros((bv, hh))
        outs = []
        for t in range(seq.shape[1]):
            g = seq[:, t] @ wih + h @ whh + b
            i, f, gg, o = (jax.nn.sigmoid(g[:, :hh]),
                           jax.nn.sigmoid(g[:, hh:2 * hh]),
                           jnp.tanh(g[:, 2 * hh:3 * hh]),
                           jax.nn.sigmoid(g[:, 3 * hh:]))
            c = f * c + i * gg
            h = o * jnp.tanh(c)
            outs.append(h)
        out = jnp.stack(outs, axis=1)
        return out[:, ::-1] if reverse else out

    of = lstm_dir(fused, p["wih_f"], p["whh_f"], p["b_f"], False)
    ob = lstm_dir(fused, p["wih_b"], p["whh_b"], p["b_b"], True)
    lstm_out = jnp.concatenate([of, ob], axis=-1)
    h = _ln(lstm_out, p["ln2_g"], p["ln2_b"])
    return h @ p["wo"] + p["bo"]


if __name__ == "__main__":
    B_V, C, HI, WI = 2, 3, 8, 8          # visual batch / image
    S, HIDDEN, TEXT_IN = 8, 32, 32       # text seq / hidden sizes
    VIS_OUT, NUM_LABELS = 32, 5

    key = jax.random.PRNGKey(0)
    k_v, k_t, k_p = jax.random.split(key, 3)
    visual_feats = jax.random.normal(k_v, (B_V, C, HI, WI), dtype=jnp.float32)
    text_feats = jax.random.normal(k_t, (1, S, TEXT_IN), dtype=jnp.float32)
    params = init_params(k_p, c=C, hi=HI, wi=WI, vis_out=VIS_OUT,
                         hidden=HIDDEN, text_in=TEXT_IN,
                         num_labels=NUM_LABELS)

    out = jax.jit(forward)(visual_feats, text_feats, params)
    out = jax.block_until_ready(out)
    assert out.shape == (B_V, S, NUM_LABELS)

    # Reference is pure f32; the kernel uses bf16 MXU operands on the
    # feed-forward matmuls (f32 accumulation), hence the slightly looser
    # tolerance.
    ref = forward_ref(visual_feats, text_feats, params)
    assert jnp.allclose(out, ref, atol=2e-2, rtol=2e-2), "mismatch vs reference"

    print("KERNEL_OK")
</pallas_src>

<mosaic_0001>
module attributes {stable_mosaic.version = 11 : i64} {
  func.func @fused_forward_kernel(%arg0: memref<2x192xf32, #tpu.memory_space<vmem>>, %arg1: memref<8x32xf32, #tpu.memory_space<vmem>>, %arg2: memref<192x32xf32, #tpu.memory_space<vmem>>, %arg3: memref<1x32xf32, #tpu.memory_space<vmem>>, %arg4: memref<32x16xf32, #tpu.memory_space<vmem>>, %arg5: memref<1x16xf32, #tpu.memory_space<vmem>>, %arg6: memref<32x32xf32, #tpu.memory_space<vmem>>, %arg7: memref<1x32xf32, #tpu.memory_space<vmem>>, %arg8: memref<32x16xf32, #tpu.memory_space<vmem>>, %arg9: memref<1x16xf32, #tpu.memory_space<vmem>>, %arg10: memref<16x32xf32, #tpu.memory_space<vmem>>, %arg11: memref<16x32xf32, #tpu.memory_space<vmem>>, %arg12: memref<1x32xf32, #tpu.memory_space<vmem>>, %arg13: memref<1x32xf32, #tpu.memory_space<vmem>>, %arg14: memref<1x32xf32, #tpu.memory_space<vmem>>, %arg15: memref<32x64xf32, #tpu.memory_space<vmem>>, %arg16: memref<32x64xf32, #tpu.memory_space<vmem>>, %arg17: memref<16x64xf32, #tpu.memory_space<vmem>>, %arg18: memref<16x64xf32, #tpu.memory_space<vmem>>, %arg19: memref<1x64xf32, #tpu.memory_space<vmem>>, %arg20: memref<1x64xf32, #tpu.memory_space<vmem>>, %arg21: memref<1x32xf32, #tpu.memory_space<vmem>>, %arg22: memref<1x32xf32, #tpu.memory_space<vmem>>, %arg23: memref<32x128xf32, #tpu.memory_space<vmem>>, %arg24: memref<1x128xf32, #tpu.memory_space<vmem>>, %arg25: memref<2x1024xf32, #tpu.memory_space<vmem>>) attributes {dimension_semantics = [], scalar_prefetch = 0 : i64, scratch_operands = 0 : i64, tpu.core_type = #tpu.core_type<tc>} {
    %c0 = arith.constant 0 : index
    %c0_0 = arith.constant 0 : index
    %0 = vector.load %arg0[%c0, %c0_0] : memref<2x192xf32, #tpu.memory_space<vmem>>, vector<2x192xf32>
    %c0_1 = arith.constant 0 : index
    %c0_2 = arith.constant 0 : index
    %1 = vector.load %arg2[%c0_1, %c0_2] : memref<192x32xf32, #tpu.memory_space<vmem>>, vector<192x32xf32>
    %2 = arith.truncf %0 : vector<2x192xf32> to vector<2x192xbf16>
    %3 = arith.truncf %1 : vector<192x32xf32> to vector<192x32xbf16>
    %cst = arith.constant dense<0.000000e+00> : vector<2x32xf32>
    %4 = tpu.matmul %2, %3, %cst {dimension_numbers = #tpu.dot_dimension_numbers<[1], [0], [0], [1], [0, 0, 1, 1], [], []>} : vector<2x192xbf16>, vector<192x32xbf16>, vector<2x32xf32> -> vector<2x32xf32>
    %c0_3 = arith.constant 0 : index
    %c0_4 = arith.constant 0 : index
    %5 = vector.load %arg3[%c0_3, %c0_4] : memref<1x32xf32, #tpu.memory_space<vmem>>, vector<1x32xf32>
    %6 = vector.broadcast %5 : vector<1x32xf32> to vector<2x32xf32>
    %7 = arith.addf %4, %6 : vector<2x32xf32>
    %c0_5 = arith.constant 0 : index
    %c0_6 = arith.constant 0 : index
    %8 = vector.load %arg4[%c0_5, %c0_6] : memref<32x16xf32, #tpu.memory_space<vmem>>, vector<32x16xf32>
    %9 = arith.truncf %7 : vector<2x32xf32> to vector<2x32xbf16>
    %10 = arith.truncf %8 : vector<32x16xf32> to vector<32x16xbf16>
    %cst_7 = arith.constant dense<0.000000e+00> : vector<2x16xf32>
    %11 = tpu.matmul %9, %10, %cst_7 {dimension_numbers = #tpu.dot_dimension_numbers<[1], [0], [0], [1], [0, 0, 1, 1], [], []>} : vector<2x32xbf16>, vector<32x16xbf16>, vector<2x16xf32> -> vector<2x16xf32>
    %c0_8 = arith.constant 0 : index
    %c0_9 = arith.constant 0 : index
    %12 = vector.load %arg5[%c0_8, %c0_9] : memref<1x16xf32, #tpu.memory_space<vmem>>, vector<1x16xf32>
    %13 = vector.broadcast %12 : vector<1x16xf32> to vector<2x16xf32>
    %14 = arith.addf %11, %13 : vector<2x16xf32>
    %cst_10 = arith.constant 5.000000e-01 : f32
    %15 = vector.broadcast %cst_10 : f32 to vector<2x16xf32>
    %16 = arith.mulf %15, %14 : vector<2x16xf32>
    %cst_11 = arith.constant 1.41421354 : f32
    %17 = vector.broadcast %cst_11 : f32 to vector<2x16xf32>
    %18 = arith.divf %14, %17 : vector<2x16xf32>
    %19 = math.erf %18 : vector<2x16xf32>
    %cst_12 = arith.constant 1.000000e+00 : f32
    %20 = vector.broadcast %cst_12 : f32 to vector<2x16xf32>
    %21 = arith.addf %20, %19 : vector<2x16xf32>
    %22 = arith.mulf %16, %21 : vector<2x16xf32>
    %c0_13 = arith.constant 0 : index
    %c0_14 = arith.constant 0 : index
    %23 = vector.load %arg1[%c0_13, %c0_14] : memref<8x32xf32, #tpu.memory_space<vmem>>, vector<8x32xf32>
    %c0_15 = arith.constant 0 : index
    %c0_16 = arith.constant 0 : index
    %24 = vector.load %arg6[%c0_15, %c0_16] : memref<32x32xf32, #tpu.memory_space<vmem>>, vector<32x32xf32>
    %25 = arith.truncf %23 : vector<8x32xf32> to vector<8x32xbf16>
    %26 = arith.truncf %24 : vector<32x32xf32> to vector<32x32xbf16>
    %cst_17 = arith.constant dense<0.000000e+00> : vector<8x32xf32>
    %27 = tpu.matmul %25, %26, %cst_17 {dimension_numbers = #tpu.dot_dimension_numbers<[1], [0], [0], [1], [0, 0, 1, 1], [], []>} : vector<8x32xbf16>, vector<32x32xbf16>, vector<8x32xf32> -> vector<8x32xf32>
    %c0_18 = arith.constant 0 : index
    %c0_19 = arith.constant 0 : index
    %28 = vector.load %arg7[%c0_18, %c0_19] : memref<1x32xf32, #tpu.memory_space<vmem>>, vector<1x32xf32>
    %29 = vector.broadcast %28 : vector<1x32xf32> to vector<8x32xf32>
    %30 = arith.addf %27, %29 : vector<8x32xf32>
    %c0_20 = arith.constant 0 : index
    %c0_21 = arith.constant 0 : index
    %31 = vector.load %arg8[%c0_20, %c0_21] : memref<32x16xf32, #tpu.memory_space<vmem>>, vector<32x16xf32>
    %32 = arith.truncf %30 : vector<8x32xf32> to vector<8x32xbf16>
    %33 = arith.truncf %31 : vector<32x16xf32> to vector<32x16xbf16>
    %cst_22 = arith.constant dense<0.000000e+00> : vector<8x16xf32>
    %34 = tpu.matmul %32, %33, %cst_22 {dimension_numbers = #tpu.dot_dimension_numbers<[1], [0], [0], [1], [0, 0, 1, 1], [], []>} : vector<8x32xbf16>, vector<32x16xbf16>, vector<8x16xf32> -> vector<8x16xf32>
    %c0_23 = arith.constant 0 : index
    %c0_24 = arith.constant 0 : index
    %35 = vector.load %arg9[%c0_23, %c0_24] : memref<1x16xf32, #tpu.memory_space<vmem>>, vector<1x16xf32>
    %36 = vector.broadcast %35 : vector<1x16xf32> to vector<8x16xf32>
    %37 = arith.addf %34, %36 : vector<8x16xf32>
    %cst_25 = arith.constant 5.000000e-01 : f32
    %38 = vector.broadcast %cst_25 : f32 to vector<8x16xf32>
    %39 = arith.mulf %38, %37 : vector<8x16xf32>
    %cst_26 = arith.constant 1.41421354 : f32
    %40 = vector.broadcast %cst_26 : f32 to vector<8x16xf32>
    %41 = arith.divf %37, %40 : vector<8x16xf32>
    %42 = math.erf %41 : vector<8x16xf32>
    %cst_27 = arith.constant 1.000000e+00 : f32
    %43 = vector.broadcast %cst_27 : f32 to vector<8x16xf32>
    %44 = arith.addf %43, %42 : vector<8x16xf32>
    %45 = arith.mulf %39, %44 : vector<8x16xf32>
    %c0_28 = arith.constant 0 : index
    %c0_29 = arith.constant 0 : index
    %46 = vector.load %arg10[%c0_28, %c0_29] : memref<16x32xf32, #tpu.memory_space<vmem>>, vector<16x32xf32>
    %47 = arith.truncf %22 : vector<2x16xf32> to vector<2x16xbf16>
    %48 = arith.truncf %46 : vector<16x32xf32> to vector<16x32xbf16>
    %cst_30 = arith.constant dense<0.000000e+00> : vector<2x32xf32>
    %49 = tpu.matmul %47, %48, %cst_30 {dimension_numbers = #tpu.dot_dimension_numbers<[1], [0], [0], [1], [0, 0, 1, 1], [], []>} : vector<2x16xbf16>, vector<16x32xbf16>, vector<2x32xf32> -> vector<2x32xf32>
    %c0_31 = arith.constant 0 : index
    %c0_32 = arith.constant 0 : index
    %50 = vector.load %arg11[%c0_31, %c0_32] : memref<16x32xf32, #tpu.memory_space<vmem>>, vector<16x32xf32>
    %51 = arith.truncf %45 : vector<8x16xf32> to vector<8x16xbf16>
    %52 = arith.truncf %50 : vector<16x32xf32> to vector<16x32xbf16>
    %cst_33 = arith.constant dense<0.000000e+00> : vector<8x32xf32>
    %53 = tpu.matmul %51, %52, %cst_33 {dimension_numbers = #tpu.dot_dimension_numbers<[1], [0], [0], [1], [0, 0, 1, 1], [], []>} : vector<8x16xbf16>, vector<16x32xbf16>, vector<8x32xf32> -> vector<8x32xf32>
    %54 = vector.shape_cast %49 : vector<2x32xf32> to vector<2x1x32xf32>
    %55 = vector.shape_cast %53 : vector<8x32xf32> to vector<1x8x32xf32>
    %56 = vector.broadcast %54 : vector<2x1x32xf32> to vector<2x8x32xf32>
    %57 = vector.broadcast %55 : vector<1x8x32xf32> to vector<2x8x32xf32>
    %58 = arith.addf %56, %57 : vector<2x8x32xf32>
    %c0_34 = arith.constant 0 : index
    %c0_35 = arith.constant 0 : index
    %59 = vector.load %arg12[%c0_34, %c0_35] : memref<1x32xf32, #tpu.memory_space<vmem>>, vector<1x32xf32>
    %60 = vector.shape_cast %59 : vector<1x32xf32> to vector<1x1x32xf32>
    %61 = vector.broadcast %60 : vector<1x1x32xf32> to vector<2x8x32xf32>
    %62 = arith.addf %58, %61 : vector<2x8x32xf32>
    %c0_36 = arith.constant 0 : index
    %c0_37 = arith.constant 0 : index
    %63 = vector.load %arg13[%c0_36, %c0_37] : memref<1x32xf32, #tpu.memory_space<vmem>>, vector<1x32xf32>
    %c0_38 = arith.constant 0 : index
    %c0_39 = arith.constant 0 : index
    %64 = vector.load %arg14[%c0_38, %c0_39] : memref<1x32xf32, #tpu.memory_space<vmem>>, vector<1x32xf32>
    %cst_40 = arith.constant dense<0.000000e+00> : vector<2x8xf32>
    %65 = vector.multi_reduction <add>, %62, %cst_40 [2] : vector<2x8x32xf32> to vector<2x8xf32>
    %66 = vector.shape_cast %65 : vector<2x8xf32> to vector<2x8x1xf32>
    %cst_41 = arith.constant 3.200000e+01 : f32
    %67 = vector.broadcast %cst_41 : f32 to vector<2x8x1xf32>
    %68 = arith.divf %66, %67 : vector<2x8x1xf32>
    %69 = vector.broadcast %68 : vector<2x8x1xf32> to vector<2x8x32xf32>
    %70 = arith.subf %62, %69 : vector<2x8x32xf32>
    %71 = arith.mulf %70, %70 : vector<2x8x32xf32>
    %cst_42 = arith.constant dense<0.000000e+00> : vector<2x8xf32>
    %72 = vector.multi_reduction <add>, %71, %cst_42 [2] : vector<2x8x32xf32> to vector<2x8xf32>
    %73 = vector.shape_cast %72 : vector<2x8xf32> to vector<2x8x1xf32>
    %cst_43 = arith.constant 3.200000e+01 : f32
    %74 = vector.broadcast %cst_43 : f32 to vector<2x8x1xf32>
    %75 = arith.divf %73, %74 : vector<2x8x1xf32>
    %76 = vector.broadcast %68 : vector<2x8x1xf32> to vector<2x8x32xf32>
    %77 = arith.subf %62, %76 : vector<2x8x32xf32>
    %cst_44 = arith.constant 9.99999974E-6 : f32
    %78 = vector.broadcast %cst_44 : f32 to vector<2x8x1xf32>
    %79 = arith.addf %75, %78 : vector<2x8x1xf32>
    %80 = math.rsqrt %79 : vector<2x8x1xf32>
    %81 = vector.broadcast %80 : vector<2x8x1xf32> to vector<2x8x32xf32>
    %82 = arith.mulf %77, %81 : vector<2x8x32xf32>
    %83 = vector.shape_cast %63 : vector<1x32xf32> to vector<1x1x32xf32>
    %84 = vector.broadcast %83 : vector<1x1x32xf32> to vector<2x8x32xf32>
    %85 = arith.mulf %82, %84 : vector<2x8x32xf32>
    %86 = vector.shape_cast %64 : vector<1x32xf32> to vector<1x1x32xf32>
    %87 = vector.broadcast %86 : vector<1x1x32xf32> to vector<2x8x32xf32>
    %88 = arith.addf %85, %87 : vector<2x8x32xf32>
    %cst_45 = arith.constant 5.000000e-01 : f32
    %89 = vector.broadcast %cst_45 : f32 to vector<2x8x32xf32>
    %90 = arith.mulf %89, %88 : vector<2x8x32xf32>
    %cst_46 = arith.constant 1.41421354 : f32
    %91 = vector.broadcast %cst_46 : f32 to vector<2x8x32xf32>
    %92 = arith.divf %88, %91 : vector<2x8x32xf32>
    %93 = math.erf %92 : vector<2x8x32xf32>
    %cst_47 = arith.constant 1.000000e+00 : f32
    %94 = vector.broadcast %cst_47 : f32 to vector<2x8x32xf32>
    %95 = arith.addf %94, %93 : vector<2x8x32xf32>
    %96 = arith.mulf %90, %95 : vector<2x8x32xf32>
    %c0_48 = arith.constant 0 : index
    %c0_49 = arith.constant 0 : index
    %97 = vector.load %arg15[%c0_48, %c0_49] : memref<32x64xf32, #tpu.memory_space<vmem>>, vector<32x64xf32>
    %c0_50 = arith.constant 0 : index
    %c0_51 = arith.constant 0 : index
    %98 = vector.load %arg16[%c0_50, %c0_51] : memref<32x64xf32, #tpu.memory_space<vmem>>, vector<32x64xf32>
    %99 = tpu.concatenate %97, %98 in 1 : vector<32x64xf32>, vector<32x64xf32> -> vector<32x128xf32>
    %c0_52 = arith.constant 0 : index
    %c0_53 = arith.constant 0 : index
    %100 = vector.load %arg19[%c0_52, %c0_53] : memref<1x64xf32, #tpu.memory_space<vmem>>, vector<1x64xf32>
    %c0_54 = arith.constant 0 : index
    %c0_55 = arith.constant 0 : index
    %101 = vector.load %arg20[%c0_54, %c0_55] : memref<1x64xf32, #tpu.memory_space<vmem>>, vector<1x64xf32>
    %102 = tpu.concatenate %100, %101 in 1 : vector<1x64xf32>, vector<1x64xf32> -> vector<1x128xf32>
    %103 = vector.extract_strided_slice %96 {offsets = [0, 0, 0], sizes = [1, 8, 32], strides = [1, 1, 1]} : vector<2x8x32xf32> to vector<1x8x32xf32>
    %104 = vector.shape_cast %103 : vector<1x8x32xf32> to vector<8x32xf32>
    %cst_56 = arith.constant dense<0.000000e+00> : vector<8x128xf32>
    %105 = tpu.matmul %104, %99, %cst_56 {dimension_numbers = #tpu.dot_dimension_numbers<[1], [0], [0], [1], [0, 0, 1, 1], [], []>} : vector<8x32xf32>, vector<32x128xf32>, vector<8x128xf32> -> vector<8x128xf32>
    %106 = vector.broadcast %102 : vector<1x128xf32> to vector<8x128xf32>
    %107 = arith.addf %105, %106 : vector<8x128xf32>
    %108 = vector.extract_strided_slice %96 {offsets = [1, 0, 0], sizes = [1, 8, 32], strides = [1, 1, 1]} : vector<2x8x32xf32> to vector<1x8x32xf32>
    %109 = vector.shape_cast %108 : vector<1x8x32xf32> to vector<8x32xf32>
    %cst_57 = arith.constant dense<0.000000e+00> : vector<8x128xf32>
    %110 = tpu.matmul %109, %99, %cst_57 {dimension_numbers = #tpu.dot_dimension_numbers<[1], [0], [0], [1], [0, 0, 1, 1], [], []>} : vector<8x32xf32>, vector<32x128xf32>, vector<8x128xf32> -> vector<8x128xf32>
    %111 = vector.broadcast %102 : vector<1x128xf32> to vector<8x128xf32>
    %112 = arith.addf %110, %111 : vector<8x128xf32>
    %113 = vector.extract_strided_slice %107 {offsets = [0, 0], sizes = [1, 128], strides = [1, 1]} : vector<8x128xf32> to vector<1x128xf32>
    %114 = vector.extract_strided_slice %112 {offsets = [0, 0], sizes = [1, 128], strides = [1, 1]} : vector<8x128xf32> to vector<1x128xf32>
    %115 = tpu.concatenate %113, %114 in 0 : vector<1x128xf32>, vector<1x128xf32> -> vector<2x128xf32>
    %116 = vector.extract_strided_slice %107 {offsets = [1, 0], sizes = [1, 128], strides = [1, 1]} : vector<8x128xf32> to vector<1x128xf32>
    %117 = vector.extract_strided_slice %112 {offsets = [1, 0], sizes = [1, 128], strides = [1, 1]} : vector<8x128xf32> to vector<1x128xf32>
    %118 = tpu.concatenate %116, %117 in 0 : vector<1x128xf32>, vector<1x128xf32> -> vector<2x128xf32>
    %119 = vector.extract_strided_slice %107 {offsets = [2, 0], sizes = [1, 128], strides = [1, 1]} : vector<8x128xf32> to vector<1x128xf32>
    %120 = vector.extract_strided_slice %112 {offsets = [2, 0], sizes = [1, 128], strides = [1, 1]} : vector<8x128xf32> to vector<1x128xf32>
    %121 = tpu.concatenate %119, %120 in 0 : vector<1x128xf32>, vector<1x128xf32> -> vector<2x128xf32>
    %122 = vector.extract_strided_slice %107 {offsets = [3, 0], sizes = [1, 128], strides = [1, 1]} : vector<8x128xf32> to vector<1x128xf32>
    %123 = vector.extract_strided_slice %112 {offsets = [3, 0], sizes = [1, 128], strides = [1, 1]} : vector<8x128xf32> to vector<1x128xf32>
    %124 = tpu.concatenate %122, %123 in 0 : vector<1x128xf32>, vector<1x128xf32> -> vector<2x128xf32>
    %125 = vector.extract_strided_slice %107 {offsets = [4, 0], sizes = [1, 128], strides = [1, 1]} : vector<8x128xf32> to vector<1x128xf32>
    %126 = vector.extract_strided_slice %112 {offsets = [4, 0], sizes = [1, 128], strides = [1, 1]} : vector<8x128xf32> to vector<1x128xf32>
    %127 = tpu.concatenate %125, %126 in 0 : vector<1x128xf32>, vector<1x128xf32> -> vector<2x128xf32>
    %128 = vector.extract_strided_slice %107 {offsets = [5, 0], sizes = [1, 128], strides = [1, 1]} : vector<8x128xf32> to vector<1x128xf32>
    %129 = vector.extract_strided_slice %112 {offsets = [5, 0], sizes = [1, 128], strides = [1, 1]} : vector<8x128xf32> to vector<1x128xf32>
    %130 = tpu.concatenate %128, %129 in 0 : vector<1x128xf32>, vector<1x128xf32> -> vector<2x128xf32>
    %131 = vector.extract_strided_slice %107 {offsets = [6, 0], sizes = [1, 128], strides = [1, 1]} : vector<8x128xf32> to vector<1x128xf32>
    %132 = vector.extract_strided_slice %112 {offsets = [6, 0], sizes = [1, 128], strides = [1, 1]} : vector<8x128xf32> to vector<1x128xf32>
    %133 = tpu.concatenate %131, %132 in 0 : vector<1x128xf32>, vector<1x128xf32> -> vector<2x128xf32>
    %134 = vector.extract_strided_slice %107 {offsets = [7, 0], sizes = [1, 128], strides = [1, 1]} : vector<8x128xf32> to vector<1x128xf32>
    %135 = vector.extract_strided_slice %112 {offsets = [7, 0], sizes = [1, 128], strides = [1, 1]} : vector<8x128xf32> to vector<1x128xf32>
    %136 = tpu.concatenate %134, %135 in 0 : vector<1x128xf32>, vector<1x128xf32> -> vector<2x128xf32>
    %c0_58 = arith.constant 0 : index
    %c0_59 = arith.constant 0 : index
    %137 = vector.load %arg17[%c0_58, %c0_59] : memref<16x64xf32, #tpu.memory_space<vmem>>, vector<16x64xf32>
    %c0_60 = arith.constant 0 : index
    %c0_61 = arith.constant 0 : index
    %138 = vector.load %arg18[%c0_60, %c0_61] : memref<16x64xf32, #tpu.memory_space<vmem>>, vector<16x64xf32>
    %cst_62 = arith.constant 0.000000e+00 : f32
    %139 = vector.broadcast %cst_62 : f32 to vector<2x16xf32>
    %cst_63 = arith.constant 0.000000e+00 : f32
    %140 = vector.broadcast %cst_63 : f32 to vector<2x16xf32>
    %cst_64 = arith.constant 0.000000e+00 : f32
    %141 = vector.broadcast %cst_64 : f32 to vector<2x16xf32>
    %cst_65 = arith.constant 0.000000e+00 : f32
    %142 = vector.broadcast %cst_65 : f32 to vector<2x16xf32>
    %143 = vector.extract_strided_slice %115 {offsets = [0, 0], sizes = [2, 64], strides = [1, 1]} : vector<2x128xf32> to vector<2x64xf32>
    %cst_66 = arith.constant dense<0.000000e+00> : vector<2x64xf32>
    %144 = tpu.matmul %139, %137, %cst_66 {dimension_numbers = #tpu.dot_dimension_numbers<[1], [0], [0], [1], [0, 0, 1, 1], [], []>} : vector<2x16xf32>, vector<16x64xf32>, vector<2x64xf32> -> vector<2x64xf32>
    %145 = arith.addf %143, %144 : vector<2x64xf32>
    %146 = vector.extract_strided_slice %145 {offsets = [0, 0], sizes = [2, 16], strides = [1, 1]} : vector<2x64xf32> to vector<2x16xf32>
    %147 = arith.negf %146 : vector<2x16xf32>
    %148 = math.exp %147 : vector<2x16xf32>
    %cst_67 = arith.constant 1.000000e+00 : f32
    %149 = vector.broadcast %cst_67 : f32 to vector<2x16xf32>
    %150 = arith.addf %149, %148 : vector<2x16xf32>
    %151 = arith.divf %149, %150 : vector<2x16xf32>
    %152 = vector.extract_strided_slice %145 {offsets = [0, 16], sizes = [2, 16], strides = [1, 1]} : vector<2x64xf32> to vector<2x16xf32>
    %153 = arith.negf %152 : vector<2x16xf32>
    %154 = math.exp %153 : vector<2x16xf32>
    %cst_68 = arith.constant 1.000000e+00 : f32
    %155 = vector.broadcast %cst_68 : f32 to vector<2x16xf32>
    %156 = arith.addf %155, %154 : vector<2x16xf32>
    %157 = arith.divf %155, %156 : vector<2x16xf32>
    %158 = vector.extract_strided_slice %145 {offsets = [0, 32], sizes = [2, 16], strides = [1, 1]} : vector<2x64xf32> to vector<2x16xf32>
    %159 = math.tanh %158 : vector<2x16xf32>
    %160 = vector.extract_strided_slice %145 {offsets = [0, 48], sizes = [2, 16], strides = [1, 1]} : vector<2x64xf32> to vector<2x16xf32>
    %161 = arith.negf %160 : vector<2x16xf32>
    %162 = math.exp %161 : vector<2x16xf32>
    %cst_69 = arith.constant 1.000000e+00 : f32
    %163 = vector.broadcast %cst_69 : f32 to vector<2x16xf32>
    %164 = arith.addf %163, %162 : vector<2x16xf32>
    %165 = arith.divf %163, %164 : vector<2x16xf32>
    %166 = arith.mulf %157, %140 : vector<2x16xf32>
    %167 = arith.mulf %151, %159 : vector<2x16xf32>
    %168 = arith.addf %166, %167 : vector<2x16xf32>
    %169 = math.tanh %168 : vector<2x16xf32>
    %170 = arith.mulf %165, %169 : vector<2x16xf32>
    %171 = vector.extract_strided_slice %136 {offsets = [0, 64], sizes = [2, 64], strides = [1, 1]} : vector<2x128xf32> to vector<2x64xf32>
    %cst_70 = arith.constant dense<0.000000e+00> : vector<2x64xf32>
    %172 = tpu.matmul %141, %138, %cst_70 {dimension_numbers = #tpu.dot_dimension_numbers<[1], [0], [0], [1], [0, 0, 1, 1], [], []>} : vector<2x16xf32>, vector<16x64xf32>, vector<2x64xf32> -> vector<2x64xf32>
    %173 = arith.addf %171, %172 : vector<2x64xf32>
    %174 = vector.extract_strided_slice %173 {offsets = [0, 0], sizes = [2, 16], strides = [1, 1]} : vector<2x64xf32> to vector<2x16xf32>
    %175 = arith.negf %174 : vector<2x16xf32>
    %176 = math.exp %175 : vector<2x16xf32>
    %cst_71 = arith.constant 1.000000e+00 : f32
    %177 = vector.broadcast %cst_71 : f32 to vector<2x16xf32>
    %178 = arith.addf %177, %176 : vector<2x16xf32>
    %179 = arith.divf %177, %178 : vector<2x16xf32>
    %180 = vector.extract_strided_slice %173 {offsets = [0, 16], sizes = [2, 16], strides = [1, 1]} : vector<2x64xf32> to vector<2x16xf32>
    %181 = arith.negf %180 : vector<2x16xf32>
    %182 = math.exp %181 : vector<2x16xf32>
    %cst_72 = arith.constant 1.000000e+00 : f32
    %183 = vector.broadcast %cst_72 : f32 to vector<2x16xf32>
    %184 = arith.addf %183, %182 : vector<2x16xf32>
    %185 = arith.divf %183, %184 : vector<2x16xf32>
    %186 = vector.extract_strided_slice %173 {offsets = [0, 32], sizes = [2, 16], strides = [1, 1]} : vector<2x64xf32> to vector<2x16xf32>
    %187 = math.tanh %186 : vector<2x16xf32>
    %188 = vector.extract_strided_slice %173 {offsets = [0, 48], sizes = [2, 16], strides = [1, 1]} : vector<2x64xf32> to vector<2x16xf32>
    %189 = arith.negf %188 : vector<2x16xf32>
    %190 = math.exp %189 : vector<2x16xf32>
    %cst_73 = arith.constant 1.000000e+00 : f32
    %191 = vector.broadcast %cst_73 : f32 to vector<2x16xf32>
    %192 = arith.addf %191, %190 : vector<2x16xf32>
    %193 = arith.divf %191, %192 : vector<2x16xf32>
    %194 = arith.mulf %185, %142 : vector<2x16xf32>
    %195 = arith.mulf %179, %187 : vector<2x16xf32>
    %196 = arith.addf %194, %195 : vector<2x16xf32>
    %197 = math.tanh %196 : vector<2x16xf32>
    %198 = arith.mulf %193, %197 : vector<2x16xf32>
    %199 = vector.extract_strided_slice %118 {offsets = [0, 0], sizes = [2, 64], strides = [1, 1]} : vector<2x128xf32> to vector<2x64xf32>
    %cst_74 = arith.constant dense<0.000000e+00> : vector<2x64xf32>
    %200 = tpu.matmul %170, %137, %cst_74 {dimension_numbers = #tpu.dot_dimension_numbers<[1], [0], [0], [1], [0, 0, 1, 1], [], []>} : vector<2x16xf32>, vector<16x64xf32>, vector<2x64xf32> -> vector<2x64xf32>
    %201 = arith.addf %199, %200 : vector<2x64xf32>
    %202 = vector.extract_strided_slice %201 {offsets = [0, 0], sizes = [2, 16], strides = [1, 1]} : vector<2x64xf32> to vector<2x16xf32>
    %203 = arith.negf %202 : vector<2x16xf32>
    %204 = math.exp %203 : vector<2x16xf32>
    %cst_75 = arith.constant 1.000000e+00 : f32
    %205 = vector.broadcast %cst_75 : f32 to vector<2x16xf32>
    %206 = arith.addf %205, %204 : vector<2x16xf32>
    %207 = arith.divf %205, %206 : vector<2x16xf32>
    %208 = vector.extract_strided_slice %201 {offsets = [0, 16], sizes = [2, 16], strides = [1, 1]} : vector<2x64xf32> to vector<2x16xf32>
    %209 = arith.negf %208 : vector<2x16xf32>
    %210 = math.exp %209 : vector<2x16xf32>
    %cst_76 = arith.constant 1.000000e+00 : f32
    %211 = vector.broadcast %cst_76 : f32 to vector<2x16xf32>
    %212 = arith.addf %211, %210 : vector<2x16xf32>
    %213 = arith.divf %211, %212 : vector<2x16xf32>
    %214 = vector.extract_strided_slice %201 {offsets = [0, 32], sizes = [2, 16], strides = [1, 1]} : vector<2x64xf32> to vector<2x16xf32>
    %215 = math.tanh %214 : vector<2x16xf32>
    %216 = vector.extract_strided_slice %201 {offsets = [0, 48], sizes = [2, 16], strides = [1, 1]} : vector<2x64xf32> to vector<2x16xf32>
    %217 = arith.negf %216 : vector<2x16xf32>
    %218 = math.exp %217 : vector<2x16xf32>
    %cst_77 = arith.constant 1.000000e+00 : f32
    %219 = vector.broadcast %cst_77 : f32 to vector<2x16xf32>
    %220 = arith.addf %219, %218 : vector<2x16xf32>
    %221 = arith.divf %219, %220 : vector<2x16xf32>
    %222 = arith.mulf %213, %168 : vector<2x16xf32>
    %223 = arith.mulf %207, %215 : vector<2x16xf32>
    %224 = arith.addf %222, %223 : vector<2x16xf32>
    %225 = math.tanh %224 : vector<2x16xf32>
    %226 = arith.mulf %221, %225 : vector<2x16xf32>
    %227 = vector.extract_strided_slice %133 {offsets = [0, 64], sizes = [2, 64], strides = [1, 1]} : vector<2x128xf32> to vector<2x64xf32>
    %cst_78 = arith.constant dense<0.000000e+00> : vector<2x64xf32>
    %228 = tpu.matmul %198, %138, %cst_78 {dimension_numbers = #tpu.dot_dimension_numbers<[1], [0], [0], [1], [0, 0, 1, 1], [], []>} : vector<2x16xf32>, vector<16x64xf32>, vector<2x64xf32> -> vector<2x64xf32>
    %229 = arith.addf %227, %228 : vector<2x64xf32>
    %230 = vector.extract_strided_slice %229 {offsets = [0, 0], sizes = [2, 16], strides = [1, 1]} : vector<2x64xf32> to vector<2x16xf32>
    %231 = arith.negf %230 : vector<2x16xf32>
    %232 = math.exp %231 : vector<2x16xf32>
    %cst_79 = arith.constant 1.000000e+00 : f32
    %233 = vector.broadcast %cst_79 : f32 to vector<2x16xf32>
    %234 = arith.addf %233, %232 : vector<2x16xf32>
    %235 = arith.divf %233, %234 : vector<2x16xf32>
    %236 = vector.extract_strided_slice %229 {offsets = [0, 16], sizes = [2, 16], strides = [1, 1]} : vector<2x64xf32> to vector<2x16xf32>
    %237 = arith.negf %236 : vector<2x16xf32>
    %238 = math.exp %237 : vector<2x16xf32>
    %cst_80 = arith.constant 1.000000e+00 : f32
    %239 = vector.broadcast %cst_80 : f32 to vector<2x16xf32>
    %240 = arith.addf %239, %238 : vector<2x16xf32>
    %241 = arith.divf %239, %240 : vector<2x16xf32>
    %242 = vector.extract_strided_slice %229 {offsets = [0, 32], sizes = [2, 16], strides = [1, 1]} : vector<2x64xf32> to vector<2x16xf32>
    %243 = math.tanh %242 : vector<2x16xf32>
    %244 = vector.extract_strided_slice %229 {offsets = [0, 48], sizes = [2, 16], strides = [1, 1]} : vector<2x64xf32> to vector<2x16xf32>
    %245 = arith.negf %244 : vector<2x16xf32>
    %246 = math.exp %245 : vector<2x16xf32>
    %cst_81 = arith.constant 1.000000e+00 : f32
    %247 = vector.broadcast %cst_81 : f32 to vector<2x16xf32>
    %248 = arith.addf %247, %246 : vector<2x16xf32>
    %249 = arith.divf %247, %248 : vector<2x16xf32>
    %250 = arith.mulf %241, %196 : vector<2x16xf32>
    %251 = arith.mulf %235, %243 : vector<2x16xf32>
    %252 = arith.addf %250, %251 : vector<2x16xf32>
    %253 = math.tanh %252 : vector<2x16xf32>
    %254 = arith.mulf %249, %253 : vector<2x16xf32>
    %255 = vector.extract_strided_slice %121 {offsets = [0, 0], sizes = [2, 64], strides = [1, 1]} : vector<2x128xf32> to vector<2x64xf32>
    %cst_82 = arith.constant dense<0.000000e+00> : vector<2x64xf32>
    %256 = tpu.matmul %226, %137, %cst_82 {dimension_numbers = #tpu.dot_dimension_numbers<[1], [0], [0], [1], [0, 0, 1, 1], [], []>} : vector<2x16xf32>, vector<16x64xf32>, vector<2x64xf32> -> vector<2x64xf32>
    %257 = arith.addf %255, %256 : vector<2x64xf32>
    %258 = vector.extract_strided_slice %257 {offsets = [0, 0], sizes = [2, 16], strides = [1, 1]} : vector<2x64xf32> to vector<2x16xf32>
    %259 = arith.negf %258 : vector<2x16xf32>
    %260 = math.exp %259 : vector<2x16xf32>
    %cst_83 = arith.constant 1.000000e+00 : f32
    %261 = vector.broadcast %cst_83 : f32 to vector<2x16xf32>
    %262 = arith.addf %261, %260 : vector<2x16xf32>
    %263 = arith.divf %261, %262 : vector<2x16xf32>
    %264 = vector.extract_strided_slice %257 {offsets = [0, 16], sizes = [2, 16], strides = [1, 1]} : vector<2x64xf32> to vector<2x16xf32>
    %265 = arith.negf %264 : vector<2x16xf32>
    %266 = math.exp %265 : vector<2x16xf32>
    %cst_84 = arith.constant 1.000000e+00 : f32
    %267 = vector.broadcast %cst_84 : f32 to vector<2x16xf32>
    %268 = arith.addf %267, %266 : vector<2x16xf32>
    %269 = arith.divf %267, %268 : vector<2x16xf32>
    %270 = vector.extract_strided_slice %257 {offsets = [0, 32], sizes = [2, 16], strides = [1, 1]} : vector<2x64xf32> to vector<2x16xf32>
    %271 = math.tanh %270 : vector<2x16xf32>
    %272 = vector.extract_strided_slice %257 {offsets = [0, 48], sizes = [2, 16], strides = [1, 1]} : vector<2x64xf32> to vector<2x16xf32>
    %273 = arith.negf %272 : vector<2x16xf32>
    %274 = math.exp %273 : vector<2x16xf32>
    %cst_85 = arith.constant 1.000000e+00 : f32
    %275 = vector.broadcast %cst_85 : f32 to vector<2x16xf32>
    %276 = arith.addf %275, %274 : vector<2x16xf32>
    %277 = arith.divf %275, %276 : vector<2x16xf32>
    %278 = arith.mulf %269, %224 : vector<2x16xf32>
    %279 = arith.mulf %263, %271 : vector<2x16xf32>
    %280 = arith.addf %278, %279 : vector<2x16xf32>
    %281 = math.tanh %280 : vector<2x16xf32>
    %282 = arith.mulf %277, %281 : vector<2x16xf32>
    %283 = vector.extract_strided_slice %130 {offsets = [0, 64], sizes = [2, 64], strides = [1, 1]} : vector<2x128xf32> to vector<2x64xf32>
    %cst_86 = arith.constant dense<0.000000e+00> : vector<2x64xf32>
    %284 = tpu.matmul %254, %138, %cst_86 {dimension_numbers = #tpu.dot_dimension_numbers<[1], [0], [0], [1], [0, 0, 1, 1], [], []>} : vector<2x16xf32>, vector<16x64xf32>, vector<2x64xf32> -> vector<2x64xf32>
    %285 = arith.addf %283, %284 : vector<2x64xf32>
    %286 = vector.extract_strided_slice %285 {offsets = [0, 0], sizes = [2, 16], strides = [1, 1]} : vector<2x64xf32> to vector<2x16xf32>
    %287 = arith.negf %286 : vector<2x16xf32>
    %288 = math.exp %287 : vector<2x16xf32>
    %cst_87 = arith.constant 1.000000e+00 : f32
    %289 = vector.broadcast %cst_87 : f32 to vector<2x16xf32>
    %290 = arith.addf %289, %288 : vector<2x16xf32>
    %291 = arith.divf %289, %290 : vector<2x16xf32>
    %292 = vector.extract_strided_slice %285 {offsets = [0, 16], sizes = [2, 16], strides = [1, 1]} : vector<2x64xf32> to vector<2x16xf32>
    %293 = arith.negf %292 : vector<2x16xf32>
    %294 = math.exp %293 : vector<2x16xf32>
    %cst_88 = arith.constant 1.000000e+00 : f32
    %295 = vector.broadcast %cst_88 : f32 to vector<2x16xf32>
    %296 = arith.addf %295, %294 : vector<2x16xf32>
    %297 = arith.divf %295, %296 : vector<2x16xf32>
    %298 = vector.extract_strided_slice %285 {offsets = [0, 32], sizes = [2, 16], strides = [1, 1]} : vector<2x64xf32> to vector<2x16xf32>
    %299 = math.tanh %298 : vector<2x16xf32>
    %300 = vector.extract_strided_slice %285 {offsets = [0, 48], sizes = [2, 16], strides = [1, 1]} : vector<2x64xf32> to vector<2x16xf32>
    %301 = arith.negf %300 : vector<2x16xf32>
    %302 = math.exp %301 : vector<2x16xf32>
    %cst_89 = arith.constant 1.000000e+00 : f32
    %303 = vector.broadcast %cst_89 : f32 to vector<2x16xf32>
    %304 = arith.addf %303, %302 : vector<2x16xf32>
    %305 = arith.divf %303, %304 : vector<2x16xf32>
    %306 = arith.mulf %297, %252 : vector<2x16xf32>
    %307 = arith.mulf %291, %299 : vector<2x16xf32>
    %308 = arith.addf %306, %307 : vector<2x16xf32>
    %309 = math.tanh %308 : vector<2x16xf32>
    %310 = arith.mulf %305, %309 : vector<2x16xf32>
    %311 = vector.extract_strided_slice %124 {offsets = [0, 0], sizes = [2, 64], strides = [1, 1]} : vector<2x128xf32> to vector<2x64xf32>
    %cst_90 = arith.constant dense<0.000000e+00> : vector<2x64xf32>
    %312 = tpu.matmul %282, %137, %cst_90 {dimension_numbers = #tpu.dot_dimension_numbers<[1], [0], [0], [1], [0, 0, 1, 1], [], []>} : vector<2x16xf32>, vector<16x64xf32>, vector<2x64xf32> -> vector<2x64xf32>
    %313 = arith.addf %311, %312 : vector<2x64xf32>
    %314 = vector.extract_strided_slice %313 {offsets = [0, 0], sizes = [2, 16], strides = [1, 1]} : vector<2x64xf32> to vector<2x16xf32>
    %315 = arith.negf %314 : vector<2x16xf32>
    %316 = math.exp %315 : vector<2x16xf32>
    %cst_91 = arith.constant 1.000000e+00 : f32
    %317 = vector.broadcast %cst_91 : f32 to vector<2x16xf32>
    %318 = arith.addf %317, %316 : vector<2x16xf32>
    %319 = arith.divf %317, %318 : vector<2x16xf32>
    %320 = vector.extract_strided_slice %313 {offsets = [0, 16], sizes = [2, 16], strides = [1, 1]} : vector<2x64xf32> to vector<2x16xf32>
    %321 = arith.negf %320 : vector<2x16xf32>
    %322 = math.exp %321 : vector<2x16xf32>
    %cst_92 = arith.constant 1.000000e+00 : f32
    %323 = vector.broadcast %cst_92 : f32 to vector<2x16xf32>
    %324 = arith.addf %323, %322 : vector<2x16xf32>
    %325 = arith.divf %323, %324 : vector<2x16xf32>
    %326 = vector.extract_strided_slice %313 {offsets = [0, 32], sizes = [2, 16], strides = [1, 1]} : vector<2x64xf32> to vector<2x16xf32>
    %327 = math.tanh %326 : vector<2x16xf32>
    %328 = vector.extract_strided_slice %313 {offsets = [0, 48], sizes = [2, 16], strides = [1, 1]} : vector<2x64xf32> to vector<2x16xf32>
    %329 = arith.negf %328 : vector<2x16xf32>
    %330 = math.exp %329 : vector<2x16xf32>
    %cst_93 = arith.constant 1.000000e+00 : f32
    %331 = vector.broadcast %cst_93 : f32 to vector<2x16xf32>
    %332 = arith.addf %331, %330 : vector<2x16xf32>
    %333 = arith.divf %331, %332 : vector<2x16xf32>
    %334 = arith.mulf %325, %280 : vector<2x16xf32>
    %335 = arith.mulf %319, %327 : vector<2x16xf32>
    %336 = arith.addf %334, %335 : vector<2x16xf32>
    %337 = math.tanh %336 : vector<2x16xf32>
    %338 = arith.mulf %333, %337 : vector<2x16xf32>
    %339 = vector.extract_strided_slice %127 {offsets = [0, 64], sizes = [2, 64], strides = [1, 1]} : vector<2x128xf32> to vector<2x64xf32>
    %cst_94 = arith.constant dense<0.000000e+00> : vector<2x64xf32>
    %340 = tpu.matmul %310, %138, %cst_94 {dimension_numbers = #tpu.dot_dimension_numbers<[1], [0], [0], [1], [0, 0, 1, 1], [], []>} : vector<2x16xf32>, vector<16x64xf32>, vector<2x64xf32> -> vector<2x64xf32>
    %341 = arith.addf %339, %340 : vector<2x64xf32>
    %342 = vector.extract_strided_slice %341 {offsets = [0, 0], sizes = [2, 16], strides = [1, 1]} : vector<2x64xf32> to vector<2x16xf32>
    %343 = arith.negf %342 : vector<2x16xf32>
    %344 = math.exp %343 : vector<2x16xf32>
    %cst_95 = arith.constant 1.000000e+00 : f32
    %345 = vector.broadcast %cst_95 : f32 to vector<2x16xf32>
    %346 = arith.addf %345, %344 : vector<2x16xf32>
    %347 = arith.divf %345, %346 : vector<2x16xf32>
    %348 = vector.extract_strided_slice %341 {offsets = [0, 16], sizes = [2, 16], strides = [1, 1]} : vector<2x64xf32> to vector<2x16xf32>
    %349 = arith.negf %348 : vector<2x16xf32>
    %350 = math.exp %349 : vector<2x16xf32>
    %cst_96 = arith.constant 1.000000e+00 : f32
    %351 = vector.broadcast %cst_96 : f32 to vector<2x16xf32>
    %352 = arith.addf %351, %350 : vector<2x16xf32>
    %353 = arith.divf %351, %352 : vector<2x16xf32>
    %354 = vector.extract_strided_slice %341 {offsets = [0, 32], sizes = [2, 16], strides = [1, 1]} : vector<2x64xf32> to vector<2x16xf32>
    %355 = math.tanh %354 : vector<2x16xf32>
    %356 = vector.extract_strided_slice %341 {offsets = [0, 48], sizes = [2, 16], strides = [1, 1]} : vector<2x64xf32> to vector<2x16xf32>
    %357 = arith.negf %356 : vector<2x16xf32>
    %358 = math.exp %357 : vector<2x16xf32>
    %cst_97 = arith.constant 1.000000e+00 : f32
    %359 = vector.broadcast %cst_97 : f32 to vector<2x16xf32>
    %360 = arith.addf %359, %358 : vector<2x16xf32>
    %361 = arith.divf %359, %360 : vector<2x16xf32>
    %362 = arith.mulf %353, %308 : vector<2x16xf32>
    %363 = arith.mulf %347, %355 : vector<2x16xf32>
    %364 = arith.addf %362, %363 : vector<2x16xf32>
    %365 = math.tanh %364 : vector<2x16xf32>
    %366 = arith.mulf %361, %365 : vector<2x16xf32>
    %367 = vector.extract_strided_slice %127 {offsets = [0, 0], sizes = [2, 64], strides = [1, 1]} : vector<2x128xf32> to vector<2x64xf32>
    %cst_98 = arith.constant dense<0.000000e+00> : vector<2x64xf32>
    %368 = tpu.matmul %338, %137, %cst_98 {dimension_numbers = #tpu.dot_dimension_numbers<[1], [0], [0], [1], [0, 0, 1, 1], [], []>} : vector<2x16xf32>, vector<16x64xf32>, vector<2x64xf32> -> vector<2x64xf32>
    %369 = arith.addf %367, %368 : vector<2x64xf32>
    %370 = vector.extract_strided_slice %369 {offsets = [0, 0], sizes = [2, 16], strides = [1, 1]} : vector<2x64xf32> to vector<2x16xf32>
    %371 = arith.negf %370 : vector<2x16xf32>
    %372 = math.exp %371 : vector<2x16xf32>
    %cst_99 = arith.constant 1.000000e+00 : f32
    %373 = vector.broadcast %cst_99 : f32 to vector<2x16xf32>
    %374 = arith.addf %373, %372 : vector<2x16xf32>
    %375 = arith.divf %373, %374 : vector<2x16xf32>
    %376 = vector.extract_strided_slice %369 {offsets = [0, 16], sizes = [2, 16], strides = [1, 1]} : vector<2x64xf32> to vector<2x16xf32>
    %377 = arith.negf %376 : vector<2x16xf32>
    %378 = math.exp %377 : vector<2x16xf32>
    %cst_100 = arith.constant 1.000000e+00 : f32
    %379 = vector.broadcast %cst_100 : f32 to vector<2x16xf32>
    %380 = arith.addf %379, %378 : vector<2x16xf32>
    %381 = arith.divf %379, %380 : vector<2x16xf32>
    %382 = vector.extract_strided_slice %369 {offsets = [0, 32], sizes = [2, 16], strides = [1, 1]} : vector<2x64xf32> to vector<2x16xf32>
    %383 = math.tanh %382 : vector<2x16xf32>
    %384 = vector.extract_strided_slice %369 {offsets = [0, 48], sizes = [2, 16], strides = [1, 1]} : vector<2x64xf32> to vector<2x16xf32>
    %385 = arith.negf %384 : vector<2x16xf32>
    %386 = math.exp %385 : vector<2x16xf32>
    %cst_101 = arith.constant 1.000000e+00 : f32
    %387 = vector.broadcast %cst_101 : f32 to vector<2x16xf32>
    %388 = arith.addf %387, %386 : vector<2x16xf32>
    %389 = arith.divf %387, %388 : vector<2x16xf32>
    %390 = arith.mulf %381, %336 : vector<2x16xf32>
    %391 = arith.mulf %375, %383 : vector<2x16xf32>
    %392 = arith.addf %390, %391 : vector<2x16xf32>
    %393 = math.tanh %392 : vector<2x16xf32>
    %394 = arith.mulf %389, %393 : vector<2x16xf32>
    %395 = vector.extract_strided_slice %124 {offsets = [0, 64], sizes = [2, 64], strides = [1, 1]} : vector<2x128xf32> to vector<2x64xf32>
    %cst_102 = arith.constant dense<0.000000e+00> : vector<2x64xf32>
    %396 = tpu.matmul %366, %138, %cst_102 {dimension_numbers = #tpu.dot_dimension_numbers<[1], [0], [0], [1], [0, 0, 1, 1], [], []>} : vector<2x16xf32>, vector<16x64xf32>, vector<2x64xf32> -> vector<2x64xf32>
    %397 = arith.addf %395, %396 : vector<2x64xf32>
    %398 = vector.extract_strided_slice %397 {offsets = [0, 0], sizes = [2, 16], strides = [1, 1]} : vector<2x64xf32> to vector<2x16xf32>
    %399 = arith.negf %398 : vector<2x16xf32>
    %400 = math.exp %399 : vector<2x16xf32>
    %cst_103 = arith.constant 1.000000e+00 : f32
    %401 = vector.broadcast %cst_103 : f32 to vector<2x16xf32>
    %402 = arith.addf %401, %400 : vector<2x16xf32>
    %403 = arith.divf %401, %402 : vector<2x16xf32>
    %404 = vector.extract_strided_slice %397 {offsets = [0, 16], sizes = [2, 16], strides = [1, 1]} : vector<2x64xf32> to vector<2x16xf32>
    %405 = arith.negf %404 : vector<2x16xf32>
    %406 = math.exp %405 : vector<2x16xf32>
    %cst_104 = arith.constant 1.000000e+00 : f32
    %407 = vector.broadcast %cst_104 : f32 to vector<2x16xf32>
    %408 = arith.addf %407, %406 : vector<2x16xf32>
    %409 = arith.divf %407, %408 : vector<2x16xf32>
    %410 = vector.extract_strided_slice %397 {offsets = [0, 32], sizes = [2, 16], strides = [1, 1]} : vector<2x64xf32> to vector<2x16xf32>
    %411 = math.tanh %410 : vector<2x16xf32>
    %412 = vector.extract_strided_slice %397 {offsets = [0, 48], sizes = [2, 16], strides = [1, 1]} : vector<2x64xf32> to vector<2x16xf32>
    %413 = arith.negf %412 : vector<2x16xf32>
    %414 = math.exp %413 : vector<2x16xf32>
    %cst_105 = arith.constant 1.000000e+00 : f32
    %415 = vector.broadcast %cst_105 : f32 to vector<2x16xf32>
    %416 = arith.addf %415, %414 : vector<2x16xf32>
    %417 = arith.divf %415, %416 : vector<2x16xf32>
    %418 = arith.mulf %409, %364 : vector<2x16xf32>
    %419 = arith.mulf %403, %411 : vector<2x16xf32>
    %420 = arith.addf %418, %419 : vector<2x16xf32>
    %421 = math.tanh %420 : vector<2x16xf32>
    %422 = arith.mulf %417, %421 : vector<2x16xf32>
    %423 = vector.extract_strided_slice %130 {offsets = [0, 0], sizes = [2, 64], strides = [1, 1]} : vector<2x128xf32> to vector<2x64xf32>
    %cst_106 = arith.constant dense<0.000000e+00> : vector<2x64xf32>
    %424 = tpu.matmul %394, %137, %cst_106 {dimension_numbers = #tpu.dot_dimension_numbers<[1], [0], [0], [1], [0, 0, 1, 1], [], []>} : vector<2x16xf32>, vector<16x64xf32>, vector<2x64xf32> -> vector<2x64xf32>
    %425 = arith.addf %423, %424 : vector<2x64xf32>
    %426 = vector.extract_strided_slice %425 {offsets = [0, 0], sizes = [2, 16], strides = [1, 1]} : vector<2x64xf32> to vector<2x16xf32>
    %427 = arith.negf %426 : vector<2x16xf32>
    %428 = math.exp %427 : vector<2x16xf32>
    %cst_107 = arith.constant 1.000000e+00 : f32
    %429 = vector.broadcast %cst_107 : f32 to vector<2x16xf32>
    %430 = arith.addf %429, %428 : vector<2x16xf32>
    %431 = arith.divf %429, %430 : vector<2x16xf32>
    %432 = vector.extract_strided_slice %425 {offsets = [0, 16], sizes = [2, 16], strides = [1, 1]} : vector<2x64xf32> to vector<2x16xf32>
    %433 = arith.negf %432 : vector<2x16xf32>
    %434 = math.exp %433 : vector<2x16xf32>
    %cst_108 = arith.constant 1.000000e+00 : f32
    %435 = vector.broadcast %cst_108 : f32 to vector<2x16xf32>
    %436 = arith.addf %435, %434 : vector<2x16xf32>
    %437 = arith.divf %435, %436 : vector<2x16xf32>
    %438 = vector.extract_strided_slice %425 {offsets = [0, 32], sizes = [2, 16], strides = [1, 1]} : vector<2x64xf32> to vector<2x16xf32>
    %439 = math.tanh %438 : vector<2x16xf32>
    %440 = vector.extract_strided_slice %425 {offsets = [0, 48], sizes = [2, 16], strides = [1, 1]} : vector<2x64xf32> to vector<2x16xf32>
    %441 = arith.negf %440 : vector<2x16xf32>
    %442 = math.exp %441 : vector<2x16xf32>
    %cst_109 = arith.constant 1.000000e+00 : f32
    %443 = vector.broadcast %cst_109 : f32 to vector<2x16xf32>
    %444 = arith.addf %443, %442 : vector<2x16xf32>
    %445 = arith.divf %443, %444 : vector<2x16xf32>
    %446 = arith.mulf %437, %392 : vector<2x16xf32>
    %447 = arith.mulf %431, %439 : vector<2x16xf32>
    %448 = arith.addf %446, %447 : vector<2x16xf32>
    %449 = math.tanh %448 : vector<2x16xf32>
    %450 = arith.mulf %445, %449 : vector<2x16xf32>
    %451 = vector.extract_strided_slice %121 {offsets = [0, 64], sizes = [2, 64], strides = [1, 1]} : vector<2x128xf32> to vector<2x64xf32>
    %cst_110 = arith.constant dense<0.000000e+00> : vector<2x64xf32>
    %452 = tpu.matmul %422, %138, %cst_110 {dimension_numbers = #tpu.dot_dimension_numbers<[1], [0], [0], [1], [0, 0, 1, 1], [], []>} : vector<2x16xf32>, vector<16x64xf32>, vector<2x64xf32> -> vector<2x64xf32>
    %453 = arith.addf %451, %452 : vector<2x64xf32>
    %454 = vector.extract_strided_slice %453 {offsets = [0, 0], sizes = [2, 16], strides = [1, 1]} : vector<2x64xf32> to vector<2x16xf32>
    %455 = arith.negf %454 : vector<2x16xf32>
    %456 = math.exp %455 : vector<2x16xf32>
    %cst_111 = arith.constant 1.000000e+00 : f32
    %457 = vector.broadcast %cst_111 : f32 to vector<2x16xf32>
    %458 = arith.addf %457, %456 : vector<2x16xf32>
    %459 = arith.divf %457, %458 : vector<2x16xf32>
    %460 = vector.extract_strided_slice %453 {offsets = [0, 16], sizes = [2, 16], strides = [1, 1]} : vector<2x64xf32> to vector<2x16xf32>
    %461 = arith.negf %460 : vector<2x16xf32>
    %462 = math.exp %461 : vector<2x16xf32>
    %cst_112 = arith.constant 1.000000e+00 : f32
    %463 = vector.broadcast %cst_112 : f32 to vector<2x16xf32>
    %464 = arith.addf %463, %462 : vector<2x16xf32>
    %465 = arith.divf %463, %464 : vector<2x16xf32>
    %466 = vector.extract_strided_slice %453 {offsets = [0, 32], sizes = [2, 16], strides = [1, 1]} : vector<2x64xf32> to vector<2x16xf32>
    %467 = math.tanh %466 : vector<2x16xf32>
    %468 = vector.extract_strided_slice %453 {offsets = [0, 48], sizes = [2, 16], strides = [1, 1]} : vector<2x64xf32> to vector<2x16xf32>
    %469 = arith.negf %468 : vector<2x16xf32>
    %470 = math.exp %469 : vector<2x16xf32>
    %cst_113 = arith.constant 1.000000e+00 : f32
    %471 = vector.broadcast %cst_113 : f32 to vector<2x16xf32>
    %472 = arith.addf %471, %470 : vector<2x16xf32>
    %473 = arith.divf %471, %472 : vector<2x16xf32>
    %474 = arith.mulf %465, %420 : vector<2x16xf32>
    %475 = arith.mulf %459, %467 : vector<2x16xf32>
    %476 = arith.addf %474, %475 : vector<2x16xf32>
    %477 = math.tanh %476 : vector<2x16xf32>
    %478 = arith.mulf %473, %477 : vector<2x16xf32>
    %479 = vector.extract_strided_slice %133 {offsets = [0, 0], sizes = [2, 64], strides = [1, 1]} : vector<2x128xf32> to vector<2x64xf32>
    %cst_114 = arith.constant dense<0.000000e+00> : vector<2x64xf32>
    %480 = tpu.matmul %450, %137, %cst_114 {dimension_numbers = #tpu.dot_dimension_numbers<[1], [0], [0], [1], [0, 0, 1, 1], [], []>} : vector<2x16xf32>, vector<16x64xf32>, vector<2x64xf32> -> vector<2x64xf32>
    %481 = arith.addf %479, %480 : vector<2x64xf32>
    %482 = vector.extract_strided_slice %481 {offsets = [0, 0], sizes = [2, 16], strides = [1, 1]} : vector<2x64xf32> to vector<2x16xf32>
    %483 = arith.negf %482 : vector<2x16xf32>
    %484 = math.exp %483 : vector<2x16xf32>
    %cst_115 = arith.constant 1.000000e+00 : f32
    %485 = vector.broadcast %cst_115 : f32 to vector<2x16xf32>
    %486 = arith.addf %485, %484 : vector<2x16xf32>
    %487 = arith.divf %485, %486 : vector<2x16xf32>
    %488 = vector.extract_strided_slice %481 {offsets = [0, 16], sizes = [2, 16], strides = [1, 1]} : vector<2x64xf32> to vector<2x16xf32>
    %489 = arith.negf %488 : vector<2x16xf32>
    %490 = math.exp %489 : vector<2x16xf32>
    %cst_116 = arith.constant 1.000000e+00 : f32
    %491 = vector.broadcast %cst_116 : f32 to vector<2x16xf32>
    %492 = arith.addf %491, %490 : vector<2x16xf32>
    %493 = arith.divf %491, %492 : vector<2x16xf32>
    %494 = vector.extract_strided_slice %481 {offsets = [0, 32], sizes = [2, 16], strides = [1, 1]} : vector<2x64xf32> to vector<2x16xf32>
    %495 = math.tanh %494 : vector<2x16xf32>
    %496 = vector.extract_strided_slice %481 {offsets = [0, 48], sizes = [2, 16], strides = [1, 1]} : vector<2x64xf32> to vector<2x16xf32>
    %497 = arith.negf %496 : vector<2x16xf32>
    %498 = math.exp %497 : vector<2x16xf32>
    %cst_117 = arith.constant 1.000000e+00 : f32
    %499 = vector.broadcast %cst_117 : f32 to vector<2x16xf32>
    %500 = arith.addf %499, %498 : vector<2x16xf32>
    %501 = arith.divf %499, %500 : vector<2x16xf32>
    %502 = arith.mulf %493, %448 : vector<2x16xf32>
    %503 = arith.mulf %487, %495 : vector<2x16xf32>
    %504 = arith.addf %502, %503 : vector<2x16xf32>
    %505 = math.tanh %504 : vector<2x16xf32>
    %506 = arith.mulf %501, %505 : vector<2x16xf32>
    %507 = vector.extract_strided_slice %118 {offsets = [0, 64], sizes = [2, 64], strides = [1, 1]} : vector<2x128xf32> to vector<2x64xf32>
    %cst_118 = arith.constant dense<0.000000e+00> : vector<2x64xf32>
    %508 = tpu.matmul %478, %138, %cst_118 {dimension_numbers = #tpu.dot_dimension_numbers<[1], [0], [0], [1], [0, 0, 1, 1], [], []>} : vector<2x16xf32>, vector<16x64xf32>, vector<2x64xf32> -> vector<2x64xf32>
    %509 = arith.addf %507, %508 : vector<2x64xf32>
    %510 = vector.extract_strided_slice %509 {offsets = [0, 0], sizes = [2, 16], strides = [1, 1]} : vector<2x64xf32> to vector<2x16xf32>
    %511 = arith.negf %510 : vector<2x16xf32>
    %512 = math.exp %511 : vector<2x16xf32>
    %cst_119 = arith.constant 1.000000e+00 : f32
    %513 = vector.broadcast %cst_119 : f32 to vector<2x16xf32>
    %514 = arith.addf %513, %512 : vector<2x16xf32>
    %515 = arith.divf %513, %514 : vector<2x16xf32>
    %516 = vector.extract_strided_slice %509 {offsets = [0, 16], sizes = [2, 16], strides = [1, 1]} : vector<2x64xf32> to vector<2x16xf32>
    %517 = arith.negf %516 : vector<2x16xf32>
    %518 = math.exp %517 : vector<2x16xf32>
    %cst_120 = arith.constant 1.000000e+00 : f32
    %519 = vector.broadcast %cst_120 : f32 to vector<2x16xf32>
    %520 = arith.addf %519, %518 : vector<2x16xf32>
    %521 = arith.divf %519, %520 : vector<2x16xf32>
    %522 = vector.extract_strided_slice %509 {offsets = [0, 32], sizes = [2, 16], strides = [1, 1]} : vector<2x64xf32> to vector<2x16xf32>
    %523 = math.tanh %522 : vector<2x16xf32>
    %524 = vector.extract_strided_slice %509 {offsets = [0, 48], sizes = [2, 16], strides = [1, 1]} : vector<2x64xf32> to vector<2x16xf32>
    %525 = arith.negf %524 : vector<2x16xf32>
    %526 = math.exp %525 : vector<2x16xf32>
    %cst_121 = arith.constant 1.000000e+00 : f32
    %527 = vector.broadcast %cst_121 : f32 to vector<2x16xf32>
    %528 = arith.addf %527, %526 : vector<2x16xf32>
    %529 = arith.divf %527, %528 : vector<2x16xf32>
    %530 = arith.mulf %521, %476 : vector<2x16xf32>
    %531 = arith.mulf %515, %523 : vector<2x16xf32>
    %532 = arith.addf %530, %531 : vector<2x16xf32>
    %533 = math.tanh %532 : vector<2x16xf32>
    %534 = arith.mulf %529, %533 : vector<2x16xf32>
    %535 = vector.extract_strided_slice %136 {offsets = [0, 0], sizes = [2, 64], strides = [1, 1]} : vector<2x128xf32> to vector<2x64xf32>
    %cst_122 = arith.constant dense<0.000000e+00> : vector<2x64xf32>
    %536 = tpu.matmul %506, %137, %cst_122 {dimension_numbers = #tpu.dot_dimension_numbers<[1], [0], [0], [1], [0, 0, 1, 1], [], []>} : vector<2x16xf32>, vector<16x64xf32>, vector<2x64xf32> -> vector<2x64xf32>
    %537 = arith.addf %535, %536 : vector<2x64xf32>
    %538 = vector.extract_strided_slice %537 {offsets = [0, 0], sizes = [2, 16], strides = [1, 1]} : vector<2x64xf32> to vector<2x16xf32>
    %539 = arith.negf %538 : vector<2x16xf32>
    %540 = math.exp %539 : vector<2x16xf32>
    %cst_123 = arith.constant 1.000000e+00 : f32
    %541 = vector.broadcast %cst_123 : f32 to vector<2x16xf32>
    %542 = arith.addf %541, %540 : vector<2x16xf32>
    %543 = arith.divf %541, %542 : vector<2x16xf32>
    %544 = vector.extract_strided_slice %537 {offsets = [0, 16], sizes = [2, 16], strides = [1, 1]} : vector<2x64xf32> to vector<2x16xf32>
    %545 = arith.negf %544 : vector<2x16xf32>
    %546 = math.exp %545 : vector<2x16xf32>
    %cst_124 = arith.constant 1.000000e+00 : f32
    %547 = vector.broadcast %cst_124 : f32 to vector<2x16xf32>
    %548 = arith.addf %547, %546 : vector<2x16xf32>
    %549 = arith.divf %547, %548 : vector<2x16xf32>
    %550 = vector.extract_strided_slice %537 {offsets = [0, 32], sizes = [2, 16], strides = [1, 1]} : vector<2x64xf32> to vector<2x16xf32>
    %551 = math.tanh %550 : vector<2x16xf32>
    %552 = vector.extract_strided_slice %537 {offsets = [0, 48], sizes = [2, 16], strides = [1, 1]} : vector<2x64xf32> to vector<2x16xf32>
    %553 = arith.negf %552 : vector<2x16xf32>
    %554 = math.exp %553 : vector<2x16xf32>
    %cst_125 = arith.constant 1.000000e+00 : f32
    %555 = vector.broadcast %cst_125 : f32 to vector<2x16xf32>
    %556 = arith.addf %555, %554 : vector<2x16xf32>
    %557 = arith.divf %555, %556 : vector<2x16xf32>
    %558 = arith.mulf %549, %504 : vector<2x16xf32>
    %559 = arith.mulf %543, %551 : vector<2x16xf32>
    %560 = arith.addf %558, %559 : vector<2x16xf32>
    %561 = math.tanh %560 : vector<2x16xf32>
    %562 = arith.mulf %557, %561 : vector<2x16xf32>
    %563 = vector.extract_strided_slice %115 {offsets = [0, 64], sizes = [2, 64], strides = [1, 1]} : vector<2x128xf32> to vector<2x64xf32>
    %cst_126 = arith.constant dense<0.000000e+00> : vector<2x64xf32>
    %564 = tpu.matmul %534, %138, %cst_126 {dimension_numbers = #tpu.dot_dimension_numbers<[1], [0], [0], [1], [0, 0, 1, 1], [], []>} : vector<2x16xf32>, vector<16x64xf32>, vector<2x64xf32> -> vector<2x64xf32>
    %565 = arith.addf %563, %564 : vector<2x64xf32>
    %566 = vector.extract_strided_slice %565 {offsets = [0, 0], sizes = [2, 16], strides = [1, 1]} : vector<2x64xf32> to vector<2x16xf32>
    %567 = arith.negf %566 : vector<2x16xf32>
    %568 = math.exp %567 : vector<2x16xf32>
    %cst_127 = arith.constant 1.000000e+00 : f32
    %569 = vector.broadcast %cst_127 : f32 to vector<2x16xf32>
    %570 = arith.addf %569, %568 : vector<2x16xf32>
    %571 = arith.divf %569, %570 : vector<2x16xf32>
    %572 = vector.extract_strided_slice %565 {offsets = [0, 16], sizes = [2, 16], strides = [1, 1]} : vector<2x64xf32> to vector<2x16xf32>
    %573 = arith.negf %572 : vector<2x16xf32>
    %574 = math.exp %573 : vector<2x16xf32>
    %cst_128 = arith.constant 1.000000e+00 : f32
    %575 = vector.broadcast %cst_128 : f32 to vector<2x16xf32>
    %576 = arith.addf %575, %574 : vector<2x16xf32>
    %577 = arith.divf %575, %576 : vector<2x16xf32>
    %578 = vector.extract_strided_slice %565 {offsets = [0, 32], sizes = [2, 16], strides = [1, 1]} : vector<2x64xf32> to vector<2x16xf32>
    %579 = math.tanh %578 : vector<2x16xf32>
    %580 = vector.extract_strided_slice %565 {offsets = [0, 48], sizes = [2, 16], strides = [1, 1]} : vector<2x64xf32> to vector<2x16xf32>
    %581 = arith.negf %580 : vector<2x16xf32>
    %582 = math.exp %581 : vector<2x16xf32>
    %cst_129 = arith.constant 1.000000e+00 : f32
    %583 = vector.broadcast %cst_129 : f32 to vector<2x16xf32>
    %584 = arith.addf %583, %582 : vector<2x16xf32>
    %585 = arith.divf %583, %584 : vector<2x16xf32>
    %586 = arith.mulf %577, %532 : vector<2x16xf32>
    %587 = arith.mulf %571, %579 : vector<2x16xf32>
    %588 = arith.addf %586, %587 : vector<2x16xf32>
    %589 = math.tanh %588 : vector<2x16xf32>
    %590 = arith.mulf %585, %589 : vector<2x16xf32>
    %591 = tpu.concatenate %170, %590 in 1 : vector<2x16xf32>, vector<2x16xf32> -> vector<2x32xf32>
    %592 = tpu.concatenate %226, %534 in 1 : vector<2x16xf32>, vector<2x16xf32> -> vector<2x32xf32>
    %593 = tpu.concatenate %282, %478 in 1 : vector<2x16xf32>, vector<2x16xf32> -> vector<2x32xf32>
    %594 = tpu.concatenate %338, %422 in 1 : vector<2x16xf32>, vector<2x16xf32> -> vector<2x32xf32>
    %595 = tpu.concatenate %394, %366 in 1 : vector<2x16xf32>, vector<2x16xf32> -> vector<2x32xf32>
    %596 = tpu.concatenate %450, %310 in 1 : vector<2x16xf32>, vector<2x16xf32> -> vector<2x32xf32>
    %597 = tpu.concatenate %506, %254 in 1 : vector<2x16xf32>, vector<2x16xf32> -> vector<2x32xf32>
    %598 = tpu.concatenate %562, %198 in 1 : vector<2x16xf32>, vector<2x16xf32> -> vector<2x32xf32>
    %599 = tpu.concatenate %591, %592, %593, %594, %595, %596, %597, %598 in 0 : vector<2x32xf32>, vector<2x32xf32>, vector<2x32xf32>, vector<2x32xf32>, vector<2x32xf32>, vector<2x32xf32>, vector<2x32xf32>, vector<2x32xf32> -> vector<16x32xf32>
    %c0_130 = arith.constant 0 : index
    %c0_131 = arith.constant 0 : index
    %600 = vector.load %arg21[%c0_130, %c0_131] : memref<1x32xf32, #tpu.memory_space<vmem>>, vector<1x32xf32>
    %c0_132 = arith.constant 0 : index
    %c0_133 = arith.constant 0 : index
    %601 = vector.load %arg22[%c0_132, %c0_133] : memref<1x32xf32, #tpu.memory_space<vmem>>, vector<1x32xf32>
    %cst_134 = arith.constant dense<0.000000e+00> : vector<16xf32>
    %602 = vector.multi_reduction <add>, %599, %cst_134 [1] : vector<16x32xf32> to vector<16xf32>
    %603 = vector.shape_cast %602 : vector<16xf32> to vector<16x1xf32>
    %cst_135 = arith.constant 3.200000e+01 : f32
    %604 = vector.broadcast %cst_135 : f32 to vector<16x1xf32>
    %605 = arith.divf %603, %604 : vector<16x1xf32>
    %606 = vector.broadcast %605 : vector<16x1xf32> to vector<16x32xf32>
    %607 = arith.subf %599, %606 : vector<16x32xf32>
    %608 = arith.mulf %607, %607 : vector<16x32xf32>
    %cst_136 = arith.constant dense<0.000000e+00> : vector<16xf32>
    %609 = vector.multi_reduction <add>, %608, %cst_136 [1] : vector<16x32xf32> to vector<16xf32>
    %610 = vector.shape_cast %609 : vector<16xf32> to vector<16x1xf32>
    %cst_137 = arith.constant 3.200000e+01 : f32
    %611 = vector.broadcast %cst_137 : f32 to vector<16x1xf32>
    %612 = arith.divf %610, %611 : vector<16x1xf32>
    %613 = vector.broadcast %605 : vector<16x1xf32> to vector<16x32xf32>
    %614 = arith.subf %599, %613 : vector<16x32xf32>
    %cst_138 = arith.constant 9.99999974E-6 : f32
    %615 = vector.broadcast %cst_138 : f32 to vector<16x1xf32>
    %616 = arith.addf %612, %615 : vector<16x1xf32>
    %617 = math.rsqrt %616 : vector<16x1xf32>
    %618 = vector.broadcast %617 : vector<16x1xf32> to vector<16x32xf32>
    %619 = arith.mulf %614, %618 : vector<16x32xf32>
    %620 = vector.broadcast %600 : vector<1x32xf32> to vector<16x32xf32>
    %621 = arith.mulf %619, %620 : vector<16x32xf32>
    %622 = vector.broadcast %601 : vector<1x32xf32> to vector<16x32xf32>
    %623 = arith.addf %621, %622 : vector<16x32xf32>
    %c0_139 = arith.constant 0 : index
    %c0_140 = arith.constant 0 : index
    %624 = vector.load %arg23[%c0_139, %c0_140] : memref<32x128xf32, #tpu.memory_space<vmem>>, vector<32x128xf32>
    %cst_141 = arith.constant dense<0.000000e+00> : vector<16x128xf32>
    %625 = tpu.matmul %623, %624, %cst_141 {dimension_numbers = #tpu.dot_dimension_numbers<[1], [0], [0], [1], [0, 0, 1, 1], [], []>} : vector<16x32xf32>, vector<32x128xf32>, vector<16x128xf32> -> vector<16x128xf32>
    %c0_142 = arith.constant 0 : index
    %c0_143 = arith.constant 0 : index
    %626 = vector.load %arg24[%c0_142, %c0_143] : memref<1x128xf32, #tpu.memory_space<vmem>>, vector<1x128xf32>
    %627 = vector.broadcast %626 : vector<1x128xf32> to vector<16x128xf32>
    %628 = arith.addf %625, %627 : vector<16x128xf32>
    %629 = vector.extract_strided_slice %628 {offsets = [0, 0], sizes = [2, 128], strides = [1, 1]} : vector<16x128xf32> to vector<2x128xf32>
    %c0_144 = arith.constant 0 : index
    %c0_145 = arith.constant 0 : index
    %630 = vector.load %arg25[%c0_144, %c0_145] : memref<2x1024xf32, #tpu.memory_space<vmem>>, vector<2x128xf32>
    tpu.vector_store %arg25[%c0_144, %c0_145], %629 {strides = array<i32>} : memref<2x1024xf32, #tpu.memory_space<vmem>>, vector<2x128xf32>,
    %631 = vector.extract_strided_slice %628 {offsets = [2, 0], sizes = [2, 128], strides = [1, 1]} : vector<16x128xf32> to vector<2x128xf32>
    %c0_146 = arith.constant 0 : index
    %c128 = arith.constant 128 : index
    %632 = vector.load %arg25[%c0_146, %c128] : memref<2x1024xf32, #tpu.memory_space<vmem>>, vector<2x128xf32>
    tpu.vector_store %arg25[%c0_146, %c128], %631 {strides = array<i32>} : memref<2x1024xf32, #tpu.memory_space<vmem>>, vector<2x128xf32>,
    %633 = vector.extract_strided_slice %628 {offsets = [4, 0], sizes = [2, 128], strides = [1, 1]} : vector<16x128xf32> to vector<2x128xf32>
    %c0_147 = arith.constant 0 : index
    %c256 = arith.constant 256 : index
    %634 = vector.load %arg25[%c0_147, %c256] : memref<2x1024xf32, #tpu.memory_space<vmem>>, vector<2x128xf32>
    tpu.vector_store %arg25[%c0_147, %c256], %633 {strides = array<i32>} : memref<2x1024xf32, #tpu.memory_space<vmem>>, vector<2x128xf32>,
    %635 = vector.extract_strided_slice %628 {offsets = [6, 0], sizes = [2, 128], strides = [1, 1]} : vector<16x128xf32> to vector<2x128xf32>
    %c0_148 = arith.constant 0 : index
    %c384 = arith.constant 384 : index
    %636 = vector.load %arg25[%c0_148, %c384] : memref<2x1024xf32, #tpu.memory_space<vmem>>, vector<2x128xf32>
    tpu.vector_store %arg25[%c0_148, %c384], %635 {strides = array<i32>} : memref<2x1024xf32, #tpu.memory_space<vmem>>, vector<2x128xf32>,
    %637 = vector.extract_strided_slice %628 {offsets = [8, 0], sizes = [2, 128], strides = [1, 1]} : vector<16x128xf32> to vector<2x128xf32>
    %c0_149 = arith.constant 0 : index
    %c512 = arith.constant 512 : index
    %638 = vector.load %arg25[%c0_149, %c512] : memref<2x1024xf32, #tpu.memory_space<vmem>>, vector<2x128xf32>
    tpu.vector_store %arg25[%c0_149, %c512], %637 {strides = array<i32>} : memref<2x1024xf32, #tpu.memory_space<vmem>>, vector<2x128xf32>,
    %639 = vector.extract_strided_slice %628 {offsets = [10, 0], sizes = [2, 128], strides = [1, 1]} : vector<16x128xf32> to vector<2x128xf32>
    %c0_150 = arith.constant 0 : index
    %c640 = arith.constant 640 : index
    %640 = vector.load %arg25[%c0_150, %c640] : memref<2x1024xf32, #tpu.memory_space<vmem>>, vector<2x128xf32>
    tpu.vector_store %arg25[%c0_150, %c640], %639 {strides = array<i32>} : memref<2x1024xf32, #tpu.memory_space<vmem>>, vector<2x128xf32>,
    %641 = vector.extract_strided_slice %628 {offsets = [12, 0], sizes = [2, 128], strides = [1, 1]} : vector<16x128xf32> to vector<2x128xf32>
    %c0_151 = arith.constant 0 : index
    %c768 = arith.constant 768 : index
    %642 = vector.load %arg25[%c0_151, %c768] : memref<2x1024xf32, #tpu.memory_space<vmem>>, vector<2x128xf32>
    tpu.vector_store %arg25[%c0_151, %c768], %641 {strides = array<i32>} : memref<2x1024xf32, #tpu.memory_space<vmem>>, vector<2x128xf32>,
    %643 = vector.extract_strided_slice %628 {offsets = [14, 0], sizes = [2, 128], strides = [1, 1]} : vector<16x128xf32> to vector<2x128xf32>
    %c0_152 = arith.constant 0 : index
    %c896 = arith.constant 896 : index
    %644 = vector.load %arg25[%c0_152, %c896] : memref<2x1024xf32, #tpu.memory_space<vmem>>, vector<2x128xf32>
    tpu.vector_store %arg25[%c0_152, %c896], %643 {strides = array<i32>} : memref<2x1024xf32, #tpu.memory_space<vmem>>, vector<2x128xf32>,
    return
  }
}

</mosaic_0001>

<llo_original>
// kernel: forward.1
$region0: #{forward.1}
  #allocation0 [shape = 'u32[]', space=smem, size = 0x4, offset = 0x4, fixed_abs, tag = 'smem constant byte address 0x4 - core index']
  #allocation1 [shape = 'u32[72,128]{1,0:T(1,128)}', space=vmem, size = 0x9000, scoped, tag = 'internal scratch']
  %s0 = inlined_call_operand.vmem [shape: f32[2,192], index: 0, kind: input, shape index: {}]
  %s1 = inlined_call_operand.vmem [shape: f32[8,32], index: 1, kind: input, shape index: {}]
  %s2 = inlined_call_operand.vmem [shape: f32[192,32], index: 2, kind: input, shape index: {}]
  %s3 = inlined_call_operand.vmem [shape: f32[1,32], index: 3, kind: input, shape index: {}]
  %s4 = inlined_call_operand.vmem [shape: f32[32,16], index: 4, kind: input, shape index: {}]
  %s5 = inlined_call_operand.vmem [shape: f32[1,16], index: 5, kind: input, shape index: {}]
  %s6 = inlined_call_operand.vmem [shape: f32[32,32], index: 6, kind: input, shape index: {}]
  %s7 = inlined_call_operand.vmem [shape: f32[1,32], index: 7, kind: input, shape index: {}]
  %s8 = inlined_call_operand.vmem [shape: f32[32,16], index: 8, kind: input, shape index: {}]
  %s9 = inlined_call_operand.vmem [shape: f32[1,16], index: 9, kind: input, shape index: {}]
  %s10 = inlined_call_operand.vmem [shape: f32[16,32], index: 10, kind: input, shape index: {}]
  %s11 = inlined_call_operand.vmem [shape: f32[16,32], index: 11, kind: input, shape index: {}]
  %s12 = inlined_call_operand.vmem [shape: f32[1,32], index: 12, kind: input, shape index: {}]
  %s13 = inlined_call_operand.vmem [shape: f32[1,32], index: 13, kind: input, shape index: {}]
  %s14 = inlined_call_operand.vmem [shape: f32[1,32], index: 14, kind: input, shape index: {}]
  %s15 = inlined_call_operand.vmem [shape: f32[32,64], index: 15, kind: input, shape index: {}]
  %s16 = inlined_call_operand.vmem [shape: f32[32,64], index: 16, kind: input, shape index: {}]
  %s17 = inlined_call_operand.vmem [shape: f32[16,64], index: 17, kind: input, shape index: {}]
  %s18 = inlined_call_operand.vmem [shape: f32[16,64], index: 18, kind: input, shape index: {}]
  %s19 = inlined_call_operand.vmem [shape: f32[1,64], index: 19, kind: input, shape index: {}]
  %s20 = inlined_call_operand.vmem [shape: f32[1,64], index: 20, kind: input, shape index: {}]
  %s21 = inlined_call_operand.vmem [shape: f32[1,32], index: 21, kind: input, shape index: {}]
  %s22 = inlined_call_operand.vmem [shape: f32[1,32], index: 22, kind: input, shape index: {}]
  %s23 = inlined_call_operand.vmem [shape: f32[32,128], index: 23, kind: input, shape index: {}]
  %s24 = inlined_call_operand.vmem [shape: f32[1,128], index: 24, kind: input, shape index: {}]
  %s25 = inlined_call_operand.vmem [shape: f32[2,1024], index: 25, kind: output, shape index: {}]
  %s26 = sld [smem:[#allocation0]]
  $region110: #{forward.1} parent=0
    _
  %s28 = ssub.s32 1, %s26
  %s29 = scalar_select 0, %s28, %s26
  // Predicated region
  $region2: #{forward.1} parent=0 // pred_check
    _
  $region3: #{forward.1} parent=0 // pred_check_branch
    %31 = sbr.rel (0) target = $region5
  $region4: #{forward.1} parent=0 // pred_region
    _
  $region5: #{forward.1} parent=0 // pred_fallthru
    _
  // Predicated region
  $region6: #{forward.1} parent=0 // pred_check
    _
  $region7: #{forward.1} parent=0 // pred_check_branch
    %33 = sbr.rel (0) target = $region9
  $region8: #{forward.1} parent=0 // pred_region
    _
  $region9: #{forward.1} parent=0 // pred_fallthru
    _
  // Predicated region
  $region10: #{forward.1} parent=0 // pred_check
    _
  $region11: #{forward.1} parent=0 // pred_check_branch
    %35 = sbr.rel (0) target = $region13
  $region12: #{forward.1} parent=0 // pred_region
    _
  $region13: #{forward.1} parent=0 // pred_fallthru
    _
  // Predicated region
  $region14: #{forward.1} parent=0 // pred_check
    _
  $region15: #{forward.1} parent=0 // pred_check_branch
    %37 = sbr.rel (0) target = $region17
  $region16: #{forward.1} parent=0 // pred_region
    _
  $region17: #{forward.1} parent=0 // pred_fallthru
    _
  // Predicated region
  $region18: #{forward.1} parent=0 // pred_check
    _
  $region19: #{forward.1} parent=0 // pred_check_branch
    %39 = sbr.rel (0) target = $region21
  $region20: #{forward.1} parent=0 // pred_region
    _
  $region21: #{forward.1} parent=0 // pred_fallthru
    _
  // Predicated region
  $region22: #{forward.1} parent=0 // pred_check
    _
  $region23: #{forward.1} parent=0 // pred_check_branch
    %41 = sbr.rel (0) target = $region25
  $region24: #{forward.1} parent=0 // pred_region
    _
  $region25: #{forward.1} parent=0 // pred_fallthru
    _
  // Predicated region
  $region26: #{forward.1} parent=0 // pred_check
    _
  $region27: #{forward.1} parent=0 // pred_check_branch
    %43 = sbr.rel (0) target = $region29
  $region28: #{forward.1} parent=0 // pred_region
    _
  $region29: #{forward.1} parent=0 // pred_fallthru
    _
  // Predicated region
  $region30: #{forward.1} parent=0 // pred_check
    _
  $region31: #{forward.1} parent=0 // pred_check_branch
    %45 = sbr.rel (0) target = $region33
  $region32: #{forward.1} parent=0 // pred_region
    _
  $region33: #{forward.1} parent=0 // pred_fallthru
    _
  // Predicated region
  $region34: #{forward.1} parent=0 // pred_check
    _
  $region35: #{forward.1} parent=0 // pred_check_branch
    %47 = sbr.rel (0) target = $region37
  $region36: #{forward.1} parent=0 // pred_region
    _
  $region37: #{forward.1} parent=0 // pred_fallthru
    _
  // Predicated region
  $region38: #{forward.1} parent=0 // pred_check
    _
  $region39: #{forward.1} parent=0 // pred_check_branch
    %49 = sbr.rel (0) target = $region41
  $region40: #{forward.1} parent=0 // pred_region
    _
  $region41: #{forward.1} parent=0 // pred_fallthru
    _
  // Predicated region
  $region42: #{forward.1} parent=0 // pred_check
    _
  $region43: #{forward.1} parent=0 // pred_check_branch
    %51 = sbr.rel (0) target = $region45
  $region44: #{forward.1} parent=0 // pred_region
    _
  $region45: #{forward.1} parent=0 // pred_fallthru
    _
  // Predicated region
  $region46: #{forward.1} parent=0 // pred_check
    _
  $region47: #{forward.1} parent=0 // pred_check_branch
    %53 = sbr.rel (0) target = $region49
  $region48: #{forward.1} parent=0 // pred_region
    _
  $region49: #{forward.1} parent=0 // pred_fallthru
    _
  // Predicated region
  $region50: #{forward.1} parent=0 // pred_check
    _
  $region51: #{forward.1} parent=0 // pred_check_branch
    %55 = sbr.rel (0) target = $region53
  $region52: #{forward.1} parent=0 // pred_region
    _
  $region53: #{forward.1} parent=0 // pred_fallthru
    _
  // Predicated region
  $region54: #{forward.1} parent=0 // pred_check
    _
  $region55: #{forward.1} parent=0 // pred_check_branch
    %57 = sbr.rel (0) target = $region57
  $region56: #{forward.1} parent=0 // pred_region
    _
  $region57: #{forward.1} parent=0 // pred_fallthru
    _
  // Predicated region
  $region58: #{forward.1} parent=0 // pred_check
    _
  $region59: #{forward.1} parent=0 // pred_check_branch
    %59 = sbr.rel (0) target = $region61
  $region60: #{forward.1} parent=0 // pred_region
    _
  $region61: #{forward.1} parent=0 // pred_fallthru
    _
  // Predicated region
  $region62: #{forward.1} parent=0 // pred_check
    _
  $region63: #{forward.1} parent=0 // pred_check_branch
    %61 = sbr.rel (0) target = $region65
  $region64: #{forward.1} parent=0 // pred_region
    _
  $region65: #{forward.1} parent=0 // pred_fallthru
    _
  // Predicated region
  $region66: #{forward.1} parent=0 // pred_check
    _
  $region67: #{forward.1} parent=0 // pred_check_branch
    %63 = sbr.rel (0) target = $region69
  $region68: #{forward.1} parent=0 // pred_region
    _
  $region69: #{forward.1} parent=0 // pred_fallthru
    _
  // Predicated region
  $region70: #{forward.1} parent=0 // pred_check
    _
  $region71: #{forward.1} parent=0 // pred_check_branch
    %65 = sbr.rel (0) target = $region73
  $region72: #{forward.1} parent=0 // pred_region
    _
  $region73: #{forward.1} parent=0 // pred_fallthru
    _
  // Predicated region
  $region74: #{forward.1} parent=0 // pred_check
    _
  $region75: #{forward.1} parent=0 // pred_check_branch
    %67 = sbr.rel (0) target = $region77
  $region76: #{forward.1} parent=0 // pred_region
    _
  $region77: #{forward.1} parent=0 // pred_fallthru
    _
  // Predicated region
  $region78: #{forward.1} parent=0 // pred_check
    _
  $region79: #{forward.1} parent=0 // pred_check_branch
    %69 = sbr.rel (0) target = $region81
  $region80: #{forward.1} parent=0 // pred_region
    _
  $region81: #{forward.1} parent=0 // pred_fallthru
    _
  // Predicated region
  $region82: #{forward.1} parent=0 // pred_check
    _
  $region83: #{forward.1} parent=0 // pred_check_branch
    %71 = sbr.rel (0) target = $region85
  $region84: #{forward.1} parent=0 // pred_region
    _
  $region85: #{forward.1} parent=0 // pred_fallthru
    _
  // Predicated region
  $region86: #{forward.1} parent=0 // pred_check
    _
  $region87: #{forward.1} parent=0 // pred_check_branch
    %73 = sbr.rel (0) target = $region89
  $region88: #{forward.1} parent=0 // pred_region
    _
  $region89: #{forward.1} parent=0 // pred_fallthru
    _
  // Predicated region
  $region90: #{forward.1} parent=0 // pred_check
    _
  $region91: #{forward.1} parent=0 // pred_check_branch
    %75 = sbr.rel (0) target = $region93
  $region92: #{forward.1} parent=0 // pred_region
    _
  $region93: #{forward.1} parent=0 // pred_fallthru
    _
  // Predicated region
  $region94: #{forward.1} parent=0 // pred_check
    _
  $region95: #{forward.1} parent=0 // pred_check_branch
    %77 = sbr.rel (0) target = $region97
  $region96: #{forward.1} parent=0 // pred_region
    _
  $region97: #{forward.1} parent=0 // pred_fallthru
    _
  // Predicated region
  $region98: #{forward.1} parent=0 // pred_check
    _
  $region99: #{forward.1} parent=0 // pred_check_branch
    %79 = sbr.rel (0) target = $region101
  $region100: #{forward.1} parent=0 // pred_region
    _
  $region101: #{forward.1} parent=0 // pred_fallthru
    _
  %v81 = vld [vmem:[%s0] sm:$0xf]
  %v82 = vld [vmem:[%s2] sm:$0xff]
  %v83 = vld [vmem:[%s2 + $0x8] sm:$0xff]
  %v84 = vld [vmem:[%s2 + $0x10] sm:$0xff]
  %v85 = vld [vmem:[%s2 + $0x18] sm:$0xff]
  %v86 = vld [vmem:[%s2 + $0x20] sm:$0xff]
  %v87 = vld [vmem:[%s2 + $0x28] sm:$0xff]
  %v88 = vld [vmem:[%s2 + $0x30] sm:$0xff]
  %v89 = vld [vmem:[%s2 + $0x38] sm:$0xff]
  %v90 = vld [vmem:[%s2 + $0x40] sm:$0xff]
  %v91 = vld [vmem:[%s2 + $0x48] sm:$0xff]
  %v92 = vld [vmem:[%s2 + $0x50] sm:$0xff]
  %v93 = vld [vmem:[%s2 + $0x58] sm:$0xff]
  %v94 = vld [vmem:[%s2 + $0x60] sm:$0xff]
  %v95 = vld [vmem:[%s2 + $0x68] sm:$0xff]
  %v96 = vld [vmem:[%s2 + $0x70] sm:$0xff]
  %v97 = vld [vmem:[%s2 + $0x78] sm:$0xff]
  %v98 = vld [vmem:[%s2 + $0x80] sm:$0xff]
  %v99 = vld [vmem:[%s2 + $0x88] sm:$0xff]
  %v100 = vld [vmem:[%s2 + $0x90] sm:$0xff]
  %v101 = vld [vmem:[%s2 + $0x98] sm:$0xff]
  %v102 = vld [vmem:[%s2 + $0xa0] sm:$0xff]
  %v103 = vld [vmem:[%s2 + $0xa8] sm:$0xff]
  %v104 = vld [vmem:[%s2 + $0xb0] sm:$0xff]
  %v105 = vld [vmem:[%s2 + $0xb8] sm:$0xff]
  %107 = vst [vmem:[#allocation1] ss:$4 sm:$0xff] %v81
  %v108 = vld.sshfl [vmem:[#allocation1] sm:$0xff pattern:$0x73625140]
  %v109 = vld.sshfl [vmem:[#allocation1 + $0x8] sm:$0xff pattern:$0x73625140]
  %v112 = vpack.c.bf16 %v108, %v108
  %v113 = vpack.c.bf16 %v109, %v109
  %v114 = vpack.c.bf16 %v83, %v82
  %v115 = vpack.c.bf16 %v85, %v84
  %v116 = vpack.c.bf16 %v87, %v86
  %v117 = vpack.c.bf16 %v89, %v88
  %v118 = vpack.c.bf16 %v91, %v90
  %v119 = vpack.c.bf16 %v93, %v92
  %v120 = vpack.c.bf16 %v95, %v94
  %v121 = vpack.c.bf16 %v97, %v96
  %v122 = vpack.c.bf16 %v99, %v98
  %v123 = vpack.c.bf16 %v101, %v100
  %v124 = vpack.c.bf16 %v103, %v102
  %v125 = vpack.c.bf16 %v105, %v104
  %v126 = vld [vmem:[%s3] sm:$0x1]
  %v128 = vperm.slane %v126, 0
  %vm130 = vcmask 523264
  %v132 = vsel %vm130, %v113, 0
  %134 = vmatpush.bf16.msra.mxu0 %v121
  %135 = vmatpush.bf16.msra.mxu0 %v120
  %136 = vmatpush.bf16.msra.mxu0 %v119
  %137 = vmatpush.bf16.msra.mxu0 %v118
  %138 = vmatpush.bf16.msra.mxu0 %v117
  %139 = vmatpush.bf16.msra.mxu0 %v116
  %140 = vmatpush.bf16.msra.mxu0 %v115
  %141 = vmatpush.bf16.msra.mxu0 %v114
  %142 = vmatmul.bf16.gmra.mxu0 %v112
  %v143 = vpop.f32.mrf.mxu0
  %v144 = vadd.f32 %v128, %v143
  %v145 = vpop.f32.mrf.mxu0
  %146 = vdwg.mxu0
  %147 = vmatpush.bf16.msra.mxu0 0
  %148 = vmatpush.bf16.msra.mxu0 0
  %149 = vmatpush.bf16.msra.mxu0 0
  %150 = vmatpush.bf16.msra.mxu0 0
  %151 = vmatpush.bf16.msra.mxu0 %v125
  %152 = vmatpush.bf16.msra.mxu0 %v124
  %153 = vmatpush.bf16.msra.mxu0 %v123
  %154 = vmatpush.bf16.msra.mxu0 %v122
  %155 = vmatmul.bf16.gmra.mxu0 %v132
  %v156 = vpop.f32.mrf.mxu0
  %v157 = vadd.f32 %v144, %v156
  %v158 = vpop.f32.mrf.mxu0
  %159 = vdwg.mxu0
  %v160 = vld [vmem:[%s4] sm:$0xff]
  %v161 = vld [vmem:[%s4 + $0x8] sm:$0xff]
  %v162 = vld [vmem:[%s4 + $0x10] sm:$0xff]
  %v163 = vld [vmem:[%s4 + $0x18] sm:$0xff]
  %v164 = vpack.c.bf16 %v157, %v157
  %v165 = vpack.c.bf16 %v161, %v160
  %v166 = vpack.c.bf16 %v163, %v162
  %v167 = vld [vmem:[%s5] sm:$0x1]
  %v169 = vperm.slane %v167, 0
  %vm171 = vcmask 261120
  %v173 = vsel %vm171, %v164, 0
  %175 = vmatpush.bf16.msra.mxu0 0
  %176 = vmatpush.bf16.msra.mxu0 0
  %177 = vmatpush.bf16.msra.mxu0 0
  %178 = vmatpush.bf16.msra.mxu0 0
  %179 = vmatpush.bf16.msra.mxu0 0
  %180 = vmatpush.bf16.msra.mxu0 0
  %181 = vmatpush.bf16.msra.mxu0 %v166
  %182 = vmatpush.bf16.msra.mxu0 %v165
  %183 = vmatmul.bf16.gmra.mxu0 %v173
  %v184 = vpop.f32.mrf.mxu0
  %v185 = vadd.f32 %v169, %v184
  %v186 = vpop.f32.mrf.mxu0
  %187 = vdwg.mxu0
  %v188 = vmul.f32 %v185, 0.5
  %v189 = vrcp.pop 1.4142135
  %v190 = vmul.f32 1.4142135, %v189
  %v191 = vsub.f32 1.0, %v190
  %v192 = vmul.f32 %v189, %v191
  %v193 = vadd.f32 %v189, %v192
  %vm194 = vweird.f32 %v189
  %v195 = vsel %vm194, %v189, %v193
  %v196 = vmul.f32 %v185, %v195
  %v197 = vmul.f32 %v196, %v196
  %v198 = vmin.f32 16.0, %v197
  %v199 = vmul.f32 %v198, 2.1237322e-06
  %v200 = vadd.f32 %v199, 0.00028619796
  %v201 = vmul.f32 %v198, %v200
  %v202 = vadd.f32 %v201, 0.0036580483
  %v203 = vmul.f32 %v198, %v202
  %v204 = vadd.f32 %v203, 0.05243302
  %v205 = vmul.f32 %v198, %v204
  %v206 = vadd.f32 %v205, 0.18741608
  %v207 = vmul.f32 %v198, %v206
  %v208 = vadd.f32 %v207, 1.1283791
  %v209 = vmul.f32 %v196, %v208
  %v210 = vmul.f32 %v198, 3.8918573e-05
  %v211 = vadd.f32 %v210, 0.001143296
  %v212 = vmul.f32 %v198, %v211
  %v213 = vadd.f32 %v212, 0.014752088
  %v214 = vmul.f32 %v198, %v213
  %v215 = vadd.f32 %v214, 0.112945676
  %v216 = vmul.f32 %v198, %v215
  %v217 = vadd.f32 %v216, 0.4994258
  %v218 = vmul.f32 %v198, %v217
  %v219 = vadd.f32 %v218, 1.0
  %v220 = vrcp.pop %v219
  %v221 = vmul.f32 %v219, %v220
  %v222 = vsub.f32 1.0, %v221
  %v223 = vmul.f32 %v220, %v222
  %v224 = vadd.f32 %v220, %v223
  %vm225 = vweird.f32 %v219
  %vm226 = vweird.f32 %v220
  %vm227 = vmor %vm225, %vm226
  %v228 = vsel %vm227, %v220, %v224
  %v229 = vand.u32 2147483647, %v219
  %vm230 = vcmp.eq.f32.partialorder %v229, 8.507059e+37
  %v231 = vand.u32 %v219, 2147483648
  %v232 = vor.u32 1.1754944e-38, %v231
  %v233 = vsel %vm230, %v232, %v228
  %v234 = vmul.f32 %v209, %v233
  %v235 = vmin.f32 %v234, 1.0
  %v236 = vmax.f32 %v235, -1.0
  %v237 = vadd.f32 %v236, 1.0
  %v238 = vmul.f32 %v188, %v237
  %v239 = vld [vmem:[%s1] sm:$0xff]
  %v240 = vld [vmem:[%s6] sm:$0xff]
  %v241 = vld [vmem:[%s6 + $0x8] sm:$0xff]
  %v242 = vld [vmem:[%s6 + $0x10] sm:$0xff]
  %v243 = vld [vmem:[%s6 + $0x18] sm:$0xff]
  %v244 = vpack.c.bf16 %v239, %v239
  %v245 = vpack.c.bf16 %v241, %v240
  %v246 = vpack.c.bf16 %v243, %v242
  %v247 = vld [vmem:[%s7] sm:$0x1]
  %v249 = vperm.slane %v247, 0
  %v252 = vsel %vm171, %v244, 0
  %254 = vmatpush.bf16.msra.mxu0 0
  %255 = vmatpush.bf16.msra.mxu0 0
  %256 = vmatpush.bf16.msra.mxu0 0
  %257 = vmatpush.bf16.msra.mxu0 0
  %258 = vmatpush.bf16.msra.mxu0 0
  %259 = vmatpush.bf16.msra.mxu0 0
  %260 = vmatpush.bf16.msra.mxu0 %v246
  %261 = vmatpush.bf16.msra.mxu0 %v245
  %262 = vmatmul.bf16.gmra.mxu0 %v252
  %v263 = vpop.f32.mrf.mxu0
  %v264 = vadd.f32 %v249, %v263
  %v265 = vpop.f32.mrf.mxu0
  %266 = vdwg.mxu0
  %v267 = vld [vmem:[%s8] sm:$0xff]
  %v268 = vld [vmem:[%s8 + $0x8] sm:$0xff]
  %v269 = vld [vmem:[%s8 + $0x10] sm:$0xff]
  %v270 = vld [vmem:[%s8 + $0x18] sm:$0xff]
  %v271 = vpack.c.bf16 %v264, %v264
  %v272 = vpack.c.bf16 %v268, %v267
  %v273 = vpack.c.bf16 %v270, %v269
  %v274 = vld [vmem:[%s9] sm:$0x1]
  %v276 = vperm.slane %v274, 0
  %v279 = vsel %vm171, %v271, 0
  %281 = vmatpush.bf16.msra.mxu0 0
  %282 = vmatpush.bf16.msra.mxu0 0
  %283 = vmatpush.bf16.msra.mxu0 0
  %284 = vmatpush.bf16.msra.mxu0 0
  %285 = vmatpush.bf16.msra.mxu0 0
  %286 = vmatpush.bf16.msra.mxu0 0
  %287 = vmatpush.bf16.msra.mxu0 %v273
  %288 = vmatpush.bf16.msra.mxu0 %v272
  %289 = vmatmul.bf16.gmra.mxu0 %v279
  %v290 = vpop.f32.mrf.mxu0
  %v291 = vadd.f32 %v276, %v290
  %v292 = vpop.f32.mrf.mxu0
  %293 = vdwg.mxu0
  %v294 = vmul.f32 %v291, 0.5
  %v295 = vmul.f32 %v291, %v195
  %v296 = vmul.f32 %v295, %v295
  %v297 = vmin.f32 16.0, %v296
  %v298 = vmul.f32 %v297, 2.1237322e-06
  %v299 = vadd.f32 %v298, 0.00028619796
  %v300 = vmul.f32 %v297, %v299
  %v301 = vadd.f32 %v300, 0.0036580483
  %v302 = vmul.f32 %v297, %v301
  %v303 = vadd.f32 %v302, 0.05243302
  %v304 = vmul.f32 %v297, %v303
  %v305 = vadd.f32 %v304, 0.18741608
  %v306 = vmul.f32 %v297, %v305
  %v307 = vadd.f32 %v306, 1.1283791
  %v308 = vmul.f32 %v295, %v307
  %v309 = vmul.f32 %v297, 3.8918573e-05
  %v310 = vadd.f32 %v309, 0.001143296
  %v311 = vmul.f32 %v297, %v310
  %v312 = vadd.f32 %v311, 0.014752088
  %v313 = vmul.f32 %v297, %v312
  %v314 = vadd.f32 %v313, 0.112945676
  %v315 = vmul.f32 %v297, %v314
  %v316 = vadd.f32 %v315, 0.4994258
  %v317 = vmul.f32 %v297, %v316
  %v318 = vadd.f32 %v317, 1.0
  %v319 = vrcp.pop %v318
  %v320 = vmul.f32 %v318, %v319
  %v321 = vsub.f32 1.0, %v320
  %v322 = vmul.f32 %v319, %v321
  %v323 = vadd.f32 %v319, %v322
  %vm324 = vweird.f32 %v318
  %vm325 = vweird.f32 %v319
  %vm326 = vmor %vm324, %vm325
  %v327 = vsel %vm326, %v319, %v323
  %v328 = vand.u32 2147483647, %v318
  %vm329 = vcmp.eq.f32.partialorder %v328, 8.507059e+37
  %v330 = vand.u32 %v318, 2147483648
  %v331 = vor.u32 1.1754944e-38, %v330
  %v332 = vsel %vm329, %v331, %v327
  %v333 = vmul.f32 %v308, %v332
  %v334 = vmin.f32 %v333, 1.0
  %v335 = vmax.f32 %v334, -1.0
  %v336 = vadd.f32 %v335, 1.0
  %v337 = vmul.f32 %v294, %v336
  %v338 = vld [vmem:[%s10] sm:$0xff]
  %v339 = vld [vmem:[%s10 + $0x8] sm:$0xff]
  %v340 = vpack.c.bf16 %v238, %v238
  %v341 = vpack.c.bf16 %v339, %v338
  %vm342 = vcmask 130048
  %v344 = vsel %vm342, %v340, 0
  %346 = vmatpush.bf16.msra.mxu0 0
  %347 = vmatpush.bf16.msra.mxu0 0
  %348 = vmatpush.bf16.msra.mxu0 0
  %349 = vmatpush.bf16.msra.mxu0 0
  %350 = vmatpush.bf16.msra.mxu0 0
  %351 = vmatpush.bf16.msra.mxu0 0
  %352 = vmatpush.bf16.msra.mxu0 0
  %353 = vmatpush.bf16.msra.mxu0 %v341
  %354 = vmatmul.bf16.gmra.mxu0 %v344
  %v355 = vpop.f32.mrf.mxu0
  %v356 = vadd.f32 0.0, %v355
  %v357 = vpop.f32.mrf.mxu0
  %358 = vdwg.mxu0
  %v359 = vld [vmem:[%s11] sm:$0xff]
  %v360 = vld [vmem:[%s11 + $0x8] sm:$0xff]
  %v361 = vpack.c.bf16 %v337, %v337
  %v362 = vpack.c.bf16 %v360, %v359
  %v364 = vsel %vm342, %v361, 0
  %366 = vmatpush.bf16.msra.mxu0 0
  %367 = vmatpush.bf16.msra.mxu0 0
  %368 = vmatpush.bf16.msra.mxu0 0
  %369 = vmatpush.bf16.msra.mxu0 0
  %370 = vmatpush.bf16.msra.mxu0 0
  %371 = vmatpush.bf16.msra.mxu0 0
  %372 = vmatpush.bf16.msra.mxu0 0
  %373 = vmatpush.bf16.msra.mxu0 %v362
  %374 = vmatmul.bf16.gmra.mxu0 %v364
  %v375 = vpop.f32.mrf.mxu0
  %v376 = vadd.f32 0.0, %v375
  %v377 = vpop.f32.mrf.mxu0
  %378 = vdwg.mxu0
  %v380 = vrot.slane %v356, 1
  %v381 = vperm.slane %v356, 0
  %v382 = vperm.slane %v380, 0
  %v385 = vadd.f32 %v381, %v376
  %v386 = vadd.f32 %v382, %v376
  %v387 = vld [vmem:[%s12] sm:$0x1]
  %v389 = vperm.slane %v387, 0
  %v391 = vadd.f32 %v385, %v389
  %v392 = vadd.f32 %v386, %v389
  %v393 = vld [vmem:[%s13] sm:$0x1]
  %v394 = vld [vmem:[%s14] sm:$0x1]
  %v395 = vsel %vm171, %v391, 0.0
  %396 = vadd.xlane.f32.xlu0 %v395
  %v397 = vpop.xlane.xlu0 %396
  %v398 = vsel %vm171, %v392, 0.0
  %399 = vadd.xlane.f32.xlu0 %v398
  %v400 = vpop.xlane.xlu0 %399
  %v401 = vrcp.pop 32.0
  %v402 = vmul.f32 32.0, %v401
  %v403 = vsub.f32 1.0, %v402
  %v404 = vmul.f32 %v401, %v403
  %v405 = vadd.f32 %v401, %v404
  %vm406 = vweird.f32 %v401
  %v407 = vsel %vm406, %v401, %v405
  %v408 = vmul.f32 %v397, %v407
  %v409 = vmul.f32 %v400, %v407
  %v410 = vsub.f32 %v391, %v408
  %v411 = vsub.f32 %v392, %v409
  %v412 = vmul.f32 %v410, %v410
  %v413 = vmul.f32 %v411, %v411
  %v414 = vsel %vm171, %v412, 0.0
  %415 = vadd.xlane.f32.xlu0 %v414
  %v416 = vpop.xlane.xlu0 %415
  %v417 = vsel %vm171, %v413, 0.0
  %418 = vadd.xlane.f32.xlu0 %v417
  %v419 = vpop.xlane.xlu0 %418
  %v420 = vmul.f32 %v416, %v407
  %v421 = vmul.f32 %v419, %v407
  %v422 = vadd.f32 %v420, 1e-05
  %v423 = vadd.f32 %v421, 1e-05
  %v424 = vrsqrt.pop %v422
  %v425 = vmul.f32 %v424, %v422
  %v426 = vmul.f32 %v425, %v424
  %v427 = vmul.f32 0.5, %v426
  %v428 = vsub.f32 1.5, %v427
  %v429 = vmul.f32 %v424, %v428
  %vm430 = vweird.f32 %v422
  %vm431 = vweird.f32 %v424
  %vm432 = vmor %vm430, %vm431
  %v433 = vsel %vm432, %v424, %v429
  %v434 = vrsqrt.pop %v423
  %v435 = vmul.f32 %v434, %v423
  %v436 = vmul.f32 %v435, %v434
  %v437 = vmul.f32 0.5, %v436
  %v438 = vsub.f32 1.5, %v437
  %v439 = vmul.f32 %v434, %v438
  %vm440 = vweird.f32 %v423
  %vm441 = vweird.f32 %v434
  %vm442 = vmor %vm440, %vm441
  %v443 = vsel %vm442, %v434, %v439
  %v444 = vmul.f32 %v410, %v433
  %v445 = vmul.f32 %v411, %v443
  %v447 = vperm.slane %v393, 0
  %v449 = vmul.f32 %v444, %v447
  %v450 = vmul.f32 %v445, %v447
  %v452 = vperm.slane %v394, 0
  %v454 = vadd.f32 %v449, %v452
  %v455 = vadd.f32 %v450, %v452
  %v456 = vmul.f32 %v454, 0.5
  %v457 = vmul.f32 %v455, 0.5
  %v458 = vmul.f32 %v454, %v195
  %v459 = vmul.f32 %v455, %v195
  %v460 = vmul.f32 %v458, %v458
  %v461 = vmin.f32 16.0, %v460
  %v462 = vmul.f32 %v461, 2.1237322e-06
  %v463 = vadd.f32 %v462, 0.00028619796
  %v464 = vmul.f32 %v461, %v463
  %v465 = vadd.f32 %v464, 0.0036580483
  %v466 = vmul.f32 %v461, %v465
  %v467 = vadd.f32 %v466, 0.05243302
  %v468 = vmul.f32 %v461, %v467
  %v469 = vadd.f32 %v468, 0.18741608
  %v470 = vmul.f32 %v461, %v469
  %v471 = vadd.f32 %v470, 1.1283791
  %v472 = vmul.f32 %v458, %v471
  %v473 = vmul.f32 %v461, 3.8918573e-05
  %v474 = vadd.f32 %v473, 0.001143296
  %v475 = vmul.f32 %v461, %v474
  %v476 = vadd.f32 %v475, 0.014752088
  %v477 = vmul.f32 %v461, %v476
  %v478 = vadd.f32 %v477, 0.112945676
  %v479 = vmul.f32 %v461, %v478
  %v480 = vadd.f32 %v479, 0.4994258
  %v481 = vmul.f32 %v461, %v480
  %v482 = vadd.f32 %v481, 1.0
  %v483 = vrcp.pop %v482
  %v484 = vmul.f32 %v482, %v483
  %v485 = vsub.f32 1.0, %v484
  %v486 = vmul.f32 %v483, %v485
  %v487 = vadd.f32 %v483, %v486
  %vm488 = vweird.f32 %v482
  %vm489 = vweird.f32 %v483
  %vm490 = vmor %vm488, %vm489
  %v491 = vsel %vm490, %v483, %v487
  %v492 = vand.u32 2147483647, %v482
  %vm493 = vcmp.eq.f32.partialorder %v492, 8.507059e+37
  %v494 = vand.u32 %v482, 2147483648
  %v495 = vor.u32 1.1754944e-38, %v494
  %v496 = vsel %vm493, %v495, %v491
  %v497 = vmul.f32 %v472, %v496
  %v498 = vmin.f32 %v497, 1.0
  %v499 = vmax.f32 %v498, -1.0
  %v500 = vmul.f32 %v459, %v459
  %v501 = vmin.f32 16.0, %v500
  %v502 = vmul.f32 %v501, 2.1237322e-06
  %v503 = vadd.f32 %v502, 0.00028619796
  %v504 = vmul.f32 %v501, %v503
  %v505 = vadd.f32 %v504, 0.0036580483
  %v506 = vmul.f32 %v501, %v505
  %v507 = vadd.f32 %v506, 0.05243302
  %v508 = vmul.f32 %v501, %v507
  %v509 = vadd.f32 %v508, 0.18741608
  %v510 = vmul.f32 %v501, %v509
  %v511 = vadd.f32 %v510, 1.1283791
  %v512 = vmul.f32 %v459, %v511
  %v513 = vmul.f32 %v501, 3.8918573e-05
  %v514 = vadd.f32 %v513, 0.001143296
  %v515 = vmul.f32 %v501, %v514
  %v516 = vadd.f32 %v515, 0.014752088
  %v517 = vmul.f32 %v501, %v516
  %v518 = vadd.f32 %v517, 0.112945676
  %v519 = vmul.f32 %v501, %v518
  %v520 = vadd.f32 %v519, 0.4994258
  %v521 = vmul.f32 %v501, %v520
  %v522 = vadd.f32 %v521, 1.0
  %v523 = vrcp.pop %v522
  %v524 = vmul.f32 %v522, %v523
  %v525 = vsub.f32 1.0, %v524
  %v526 = vmul.f32 %v523, %v525
  %v527 = vadd.f32 %v523, %v526
  %vm528 = vweird.f32 %v522
  %vm529 = vweird.f32 %v523
  %vm530 = vmor %vm528, %vm529
  %v531 = vsel %vm530, %v523, %v527
  %v532 = vand.u32 2147483647, %v522
  %vm533 = vcmp.eq.f32.partialorder %v532, 8.507059e+37
  %v534 = vand.u32 %v522, 2147483648
  %v535 = vor.u32 1.1754944e-38, %v534
  %v536 = vsel %vm533, %v535, %v531
  %v537 = vmul.f32 %v512, %v536
  %v538 = vmin.f32 %v537, 1.0
  %v539 = vmax.f32 %v538, -1.0
  %v540 = vadd.f32 %v499, 1.0
  %v541 = vadd.f32 %v539, 1.0
  %v542 = vmul.f32 %v456, %v540
  %v543 = vmul.f32 %v457, %v541
  %v544 = vld [vmem:[%s15] sm:$0xff]
  %v545 = vld [vmem:[%s15 + $0x8] sm:$0xff]
  %v546 = vld [vmem:[%s15 + $0x10] sm:$0xff]
  %v547 = vld [vmem:[%s15 + $0x18] sm:$0xff]
  %v548 = vld [vmem:[%s16] sm:$0xff]
  %v549 = vld [vmem:[%s16 + $0x8] sm:$0xff]
  %v550 = vld [vmem:[%s16 + $0x10] sm:$0xff]
  %v551 = vld [vmem:[%s16 + $0x18] sm:$0xff]
  %556 = vrot.lane.b32.xlu0 %v548, 64
  %v557 = vpop.permute.xlu0 %556
  %558 = vrot.lane.b32.xlu0 %v549, 64
  %v559 = vpop.permute.xlu0 %558
  %560 = vrot.lane.b32.xlu0 %v550, 64
  %v561 = vpop.permute.xlu0 %560
  %562 = vrot.lane.b32.xlu0 %v551, 64
  %v563 = vpop.permute.xlu0 %562
  %v568 = vsel %vm130, %v544, %v557
  %v569 = vsel %vm130, %v545, %v559
  %v570 = vsel %vm130, %v546, %v561
  %v571 = vsel %vm130, %v547, %v563
  %v572 = vld [vmem:[%s19] sm:$0x1]
  %v573 = vld [vmem:[%s20] sm:$0x1]
  %v575 = vperm.slane %v573, 0
  %576 = vrot.lane.b32.xlu0 %v575, 64
  %v577 = vpop.permute.xlu0 %576
  %v579 = vsel %vm130, %v572, %v577
  %v580 = vperm.slane %v579, 0
  %v582 = vsel %vm171, %v542, 0
  %584 = vmatpush.msra.mxu0 0.0
  %585 = vmatpush.msra.mxu0 0.0
  %586 = vmatpush.msra.mxu0 0.0
  %587 = vmatpush.msra.mxu0 0.0
  %588 = vmatpush.msra.mxu0 0.0
  %589 = vmatpush.msra.mxu0 0.0
  %590 = vmatpush.msra.mxu0 0.0
  %591 = vmatpush.msra.mxu0 0.0
  %592 = vmatpush.msra.mxu0 0.0
  %593 = vmatpush.msra.mxu0 0.0
  %594 = vmatpush.msra.mxu0 0.0
  %595 = vmatpush.msra.mxu0 0.0
  %596 = vmatpush.msra.mxu0 %v571
  %597 = vmatpush.msra.mxu0 %v570
  %598 = vmatpush.msra.mxu0 %v569
  %599 = vmatpush.msra.mxu0 %v568
  %600 = vmatmul.f32.gmra.mxu0 %v582
  %v601 = vpop.f32.mrf.mxu0
  %v602 = vadd.f32 %v580, %v601
  %603 = vdwg.mxu0
  %v605 = vsel %vm171, %v543, 0
  %607 = vmatpush.msra.mxu0 0.0
  %608 = vmatpush.msra.mxu0 0.0
  %609 = vmatpush.msra.mxu0 0.0
  %610 = vmatpush.msra.mxu0 0.0
  %611 = vmatpush.msra.mxu0 0.0
  %612 = vmatpush.msra.mxu0 0.0
  %613 = vmatpush.msra.mxu0 0.0
  %614 = vmatpush.msra.mxu0 0.0
  %615 = vmatpush.msra.mxu0 0.0
  %616 = vmatpush.msra.mxu0 0.0
  %617 = vmatpush.msra.mxu0 0.0
  %618 = vmatpush.msra.mxu0 0.0
  %619 = vmatpush.msra.mxu0 %v571
  %620 = vmatpush.msra.mxu0 %v570
  %621 = vmatpush.msra.mxu0 %v569
  %622 = vmatpush.msra.mxu0 %v568
  %623 = vmatmul.f32.gmra.mxu0 %v605
  %v624 = vpop.f32.mrf.mxu0
  %v625 = vadd.f32 %v580, %v624
  %626 = vdwg.mxu0
  %v628 = vrot.slane %v625, 7
  %vm630 = vcmask 1040384
  %v631 = vsel %vm630, %v602, %v628
  %v633 = vrot.slane %v602, 1
  %v635 = vsel %vm630, %v633, %v625
  %v636 = vrot.slane %v602, 2
  %v638 = vrot.slane %v625, 1
  %v640 = vsel %vm630, %v636, %v638
  %v641 = vrot.slane %v602, 3
  %v643 = vrot.slane %v625, 2
  %v645 = vsel %vm630, %v641, %v643
  %v646 = vrot.slane %v602, 4
  %v648 = vrot.slane %v625, 3
  %v650 = vsel %vm630, %v646, %v648
  %v651 = vrot.slane %v602, 5
  %v653 = vrot.slane %v625, 4
  %v655 = vsel %vm630, %v651, %v653
  %v656 = vrot.slane %v602, 6
  %v658 = vrot.slane %v625, 5
  %v660 = vsel %vm630, %v656, %v658
  %v661 = vrot.slane %v602, 7
  %v663 = vrot.slane %v625, 6
  %v665 = vsel %vm630, %v661, %v663
  %v666 = vld [vmem:[%s17] sm:$0xff]
  %v667 = vld [vmem:[%s17 + $0x8] sm:$0xff]
  %v668 = vld [vmem:[%s18] sm:$0xff]
  %v669 = vld [vmem:[%s18 + $0x8] sm:$0xff]
  %v671 = vsel %vm342, 0.0, 0
  %673 = vmatpush.msra.mxu0 0.0
  %674 = vmatpush.msra.mxu0 0.0
  %675 = vmatpush.msra.mxu0 0.0
  %676 = vmatpush.msra.mxu0 0.0
  %677 = vmatpush.msra.mxu0 0.0
  %678 = vmatpush.msra.mxu0 0.0
  %679 = vmatpush.msra.mxu0 0.0
  %680 = vmatpush.msra.mxu0 0.0
  %681 = vmatpush.msra.mxu0 0.0
  %682 = vmatpush.msra.mxu0 0.0
  %683 = vmatpush.msra.mxu0 0.0
  %684 = vmatpush.msra.mxu0 0.0
  %685 = vmatpush.msra.mxu0 0.0
  %686 = vmatpush.msra.mxu0 0.0
  %687 = vmatpush.msra.mxu0 %v667
  %688 = vmatpush.msra.mxu0 %v666
  %689 = vmatmul.f32.gmra.mxu0 %v671
  %v690 = vpop.f32.mrf.mxu0
  %v691 = vadd.f32 0.0, %v690
  %692 = vdwg.mxu0
  %v693 = vadd.f32 %v631, %v691
  %v694 = vxor.u32 %v693, 2147483648
  %v695 = vmul.f32 %v694, 1.442695
  %v696 = vpow.pop %v695
  %v697 = vadd.f32 %v696, 1.0
  %v698 = vrcp.pop %v697
  %v699 = vmul.f32 %v697, %v698
  %v700 = vsub.f32 1.0, %v699
  %v701 = vmul.f32 %v698, %v700
  %v702 = vadd.f32 %v698, %v701
  %vm703 = vweird.f32 %v697
  %vm704 = vweird.f32 %v698
  %vm705 = vmor %vm703, %vm704
  %v706 = vsel %vm705, %v698, %v702
  %v707 = vand.u32 2147483647, %v697
  %vm708 = vcmp.eq.f32.partialorder %v707, 8.507059e+37
  %v709 = vand.u32 %v697, 2147483648
  %v710 = vor.u32 1.1754944e-38, %v709
  %v711 = vsel %vm708, %v710, %v706
  %v712 = vmul.f32 1.0, %v711
  %v713 = vtanh.pop %v693
  %v714 = vmul.f32 %v712, 0.0
  %716 = vrot.lane.b32.xlu0 %v713, 96
  %v717 = vpop.permute.xlu0 %716
  %v719 = vmul.f32 %v712, %v717
  %721 = vrot.lane.b32.xlu0 %v719, 16
  %v722 = vpop.permute.xlu0 %721
  %v724 = vadd.f32 %v714, %v722
  %v725 = vtanh.pop %v724
  %727 = vrot.lane.b32.xlu0 %v725, 32
  %v728 = vpop.permute.xlu0 %727
  %v730 = vmul.f32 %v712, %v728
  %731 = vmatpush.msra.mxu0 0.0
  %732 = vmatpush.msra.mxu0 0.0
  %733 = vmatpush.msra.mxu0 0.0
  %734 = vmatpush.msra.mxu0 0.0
  %735 = vmatpush.msra.mxu0 0.0
  %736 = vmatpush.msra.mxu0 0.0
  %737 = vmatpush.msra.mxu0 0.0
  %738 = vmatpush.msra.mxu0 0.0
  %739 = vmatpush.msra.mxu0 0.0
  %740 = vmatpush.msra.mxu0 0.0
  %741 = vmatpush.msra.mxu0 0.0
  %742 = vmatpush.msra.mxu0 0.0
  %743 = vmatpush.msra.mxu0 0.0
  %744 = vmatpush.msra.mxu0 0.0
  %745 = vmatpush.msra.mxu0 %v669
  %746 = vmatpush.msra.mxu0 %v668
  %747 = vmatmul.f32.gmra.mxu0 %v671
  %v748 = vpop.f32.mrf.mxu0
  %v749 = vadd.f32 0.0, %v748
  %750 = vdwg.mxu0
  %752 = vrot.lane.b32.xlu0 %v749, 64
  %v753 = vpop.permute.xlu0 %752
  %v755 = vadd.f32 %v665, %v753
  %v756 = vxor.u32 %v755, 2147483648
  %v757 = vmul.f32 %v756, 1.442695
  %v758 = vpow.pop %v757
  %v759 = vadd.f32 %v758, 1.0
  %v760 = vrcp.pop %v759
  %v761 = vmul.f32 %v759, %v760
  %v762 = vsub.f32 1.0, %v761
  %v763 = vmul.f32 %v760, %v762
  %v764 = vadd.f32 %v760, %v763
  %vm765 = vweird.f32 %v759
  %vm766 = vweird.f32 %v760
  %vm767 = vmor %vm765, %vm766
  %v768 = vsel %vm767, %v760, %v764
  %v769 = vand.u32 2147483647, %v759
  %vm770 = vcmp.eq.f32.partialorder %v769, 8.507059e+37
  %v771 = vand.u32 %v759, 2147483648
  %v772 = vor.u32 1.1754944e-38, %v771
  %v773 = vsel %vm770, %v772, %v768
  %v774 = vmul.f32 1.0, %v773
  %v775 = vtanh.pop %v755
  %v776 = vmul.f32 %v774, 0.0
  %778 = vrot.lane.b32.xlu0 %v775, 96
  %v779 = vpop.permute.xlu0 %778
  %v781 = vmul.f32 %v774, %v779
  %783 = vrot.lane.b32.xlu0 %v781, 16
  %v784 = vpop.permute.xlu0 %783
  %v786 = vadd.f32 %v776, %v784
  %v787 = vtanh.pop %v786
  %789 = vrot.lane.b32.xlu0 %v787, 32
  %v790 = vpop.permute.xlu0 %789
  %v792 = vmul.f32 %v774, %v790
  %794 = vrot.lane.b32.xlu0 %v730, 80
  %v795 = vpop.permute.xlu0 %794
  %v796 = vsel %vm342, %v795, 0
  %798 = vmatpush.msra.mxu0 0.0
  %799 = vmatpush.msra.mxu0 0.0
  %800 = vmatpush.msra.mxu0 0.0
  %801 = vmatpush.msra.mxu0 0.0
  %802 = vmatpush.msra.mxu0 0.0
  %803 = vmatpush.msra.mxu0 0.0
  %804 = vmatpush.msra.mxu0 0.0
  %805 = vmatpush.msra.mxu0 0.0
  %806 = vmatpush.msra.mxu0 0.0
  %807 = vmatpush.msra.mxu0 0.0
  %808 = vmatpush.msra.mxu0 0.0
  %809 = vmatpush.msra.mxu0 0.0
  %810 = vmatpush.msra.mxu0 0.0
  %811 = vmatpush.msra.mxu0 0.0
  %812 = vmatpush.msra.mxu0 %v667
  %813 = vmatpush.msra.mxu0 %v666
  %814 = vmatmul.f32.gmra.mxu0 %v796
  %v815 = vpop.f32.mrf.mxu0
  %v816 = vadd.f32 0.0, %v815
  %817 = vdwg.mxu0
  %v818 = vadd.f32 %v635, %v816
  %v819 = vxor.u32 %v818, 2147483648
  %v820 = vmul.f32 %v819, 1.442695
  %v821 = vpow.pop %v820
  %v822 = vadd.f32 %v821, 1.0
  %v823 = vrcp.pop %v822
  %v824 = vmul.f32 %v822, %v823
  %v825 = vsub.f32 1.0, %v824
  %v826 = vmul.f32 %v823, %v825
  %v827 = vadd.f32 %v823, %v826
  %vm828 = vweird.f32 %v822
  %vm829 = vweird.f32 %v823
  %vm830 = vmor %vm828, %vm829
  %v831 = vsel %vm830, %v823, %v827
  %v832 = vand.u32 2147483647, %v822
  %vm833 = vcmp.eq.f32.partialorder %v832, 8.507059e+37
  %v834 = vand.u32 %v822, 2147483648
  %v835 = vor.u32 1.1754944e-38, %v834
  %v836 = vsel %vm833, %v835, %v831
  %v837 = vmul.f32 1.0, %v836
  %v838 = vtanh.pop %v818
  %v839 = vmul.f32 %v837, %v724
  %841 = vrot.lane.b32.xlu0 %v838, 96
  %v842 = vpop.permute.xlu0 %841
  %v844 = vmul.f32 %v837, %v842
  %846 = vrot.lane.b32.xlu0 %v844, 16
  %v847 = vpop.permute.xlu0 %846
  %v849 = vadd.f32 %v839, %v847
  %v850 = vtanh.pop %v849
  %852 = vrot.lane.b32.xlu0 %v850, 32
  %v853 = vpop.permute.xlu0 %852
  %v855 = vmul.f32 %v837, %v853
  %857 = vrot.lane.b32.xlu0 %v792, 16
  %v858 = vpop.permute.xlu0 %857
  %v859 = vsel %vm342, %v858, 0
  %861 = vmatpush.msra.mxu0 0.0
  %862 = vmatpush.msra.mxu0 0.0
  %863 = vmatpush.msra.mxu0 0.0
  %864 = vmatpush.msra.mxu0 0.0
  %865 = vmatpush.msra.mxu0 0.0
  %866 = vmatpush.msra.mxu0 0.0
  %867 = vmatpush.msra.mxu0 0.0
  %868 = vmatpush.msra.mxu0 0.0
  %869 = vmatpush.msra.mxu0 0.0
  %870 = vmatpush.msra.mxu0 0.0
  %871 = vmatpush.msra.mxu0 0.0
  %872 = vmatpush.msra.mxu0 0.0
  %873 = vmatpush.msra.mxu0 0.0
  %874 = vmatpush.msra.mxu0 0.0
  %875 = vmatpush.msra.mxu0 %v669
  %876 = vmatpush.msra.mxu0 %v668
  %877 = vmatmul.f32.gmra.mxu0 %v859
  %v878 = vpop.f32.mrf.mxu0
  %v879 = vadd.f32 0.0, %v878
  %880 = vdwg.mxu0
  %882 = vrot.lane.b32.xlu0 %v879, 64
  %v883 = vpop.permute.xlu0 %882
  %v885 = vadd.f32 %v660, %v883
  %v886 = vxor.u32 %v885, 2147483648
  %v887 = vmul.f32 %v886, 1.442695
  %v888 = vpow.pop %v887
  %v889 = vadd.f32 %v888, 1.0
  %v890 = vrcp.pop %v889
  %v891 = vmul.f32 %v889, %v890
  %v892 = vsub.f32 1.0, %v891
  %v893 = vmul.f32 %v890, %v892
  %v894 = vadd.f32 %v890, %v893
  %vm895 = vweird.f32 %v889
  %vm896 = vweird.f32 %v890
  %vm897 = vmor %vm895, %vm896
  %v898 = vsel %vm897, %v890, %v894
  %v899 = vand.u32 2147483647, %v889
  %vm900 = vcmp.eq.f32.partialorder %v899, 8.507059e+37
  %v901 = vand.u32 %v889, 2147483648
  %v902 = vor.u32 1.1754944e-38, %v901
  %v903 = vsel %vm900, %v902, %v898
  %v904 = vmul.f32 1.0, %v903
  %v905 = vtanh.pop %v885
  %v906 = vmul.f32 %v904, %v786
  %908 = vrot.lane.b32.xlu0 %v905, 96
  %v909 = vpop.permute.xlu0 %908
  %v911 = vmul.f32 %v904, %v909
  %913 = vrot.lane.b32.xlu0 %v911, 16
  %v914 = vpop.permute.xlu0 %913
  %v916 = vadd.f32 %v906, %v914
  %v917 = vtanh.pop %v916
  %919 = vrot.lane.b32.xlu0 %v917, 32
  %v920 = vpop.permute.xlu0 %919
  %v922 = vmul.f32 %v904, %v920
  %924 = vrot.lane.b32.xlu0 %v855, 80
  %v925 = vpop.permute.xlu0 %924
  %v926 = vsel %vm342, %v925, 0
  %928 = vmatpush.msra.mxu0 0.0
  %929 = vmatpush.msra.mxu0 0.0
  %930 = vmatpush.msra.mxu0 0.0
  %931 = vmatpush.msra.mxu0 0.0
  %932 = vmatpush.msra.mxu0 0.0
  %933 = vmatpush.msra.mxu0 0.0
  %934 = vmatpush.msra.mxu0 0.0
  %935 = vmatpush.msra.mxu0 0.0
  %936 = vmatpush.msra.mxu0 0.0
  %937 = vmatpush.msra.mxu0 0.0
  %938 = vmatpush.msra.mxu0 0.0
  %939 = vmatpush.msra.mxu0 0.0
  %940 = vmatpush.msra.mxu0 0.0
  %941 = vmatpush.msra.mxu0 0.0
  %942 = vmatpush.msra.mxu0 %v667
  %943 = vmatpush.msra.mxu0 %v666
  %944 = vmatmul.f32.gmra.mxu0 %v926
  %v945 = vpop.f32.mrf.mxu0
  %v946 = vadd.f32 0.0, %v945
  %947 = vdwg.mxu0
  %v948 = vadd.f32 %v640, %v946
  %v949 = vxor.u32 %v948, 2147483648
  %v950 = vmul.f32 %v949, 1.442695
  %v951 = vpow.pop %v950
  %v952 = vadd.f32 %v951, 1.0
  %v953 = vrcp.pop %v952
  %v954 = vmul.f32 %v952, %v953
  %v955 = vsub.f32 1.0, %v954
  %v956 = vmul.f32 %v953, %v955
  %v957 = vadd.f32 %v953, %v956
  %vm958 = vweird.f32 %v952
  %vm959 = vweird.f32 %v953
  %vm960 = vmor %vm958, %vm959
  %v961 = vsel %vm960, %v953, %v957
  %v962 = vand.u32 2147483647, %v952
  %vm963 = vcmp.eq.f32.partialorder %v962, 8.507059e+37
  %v964 = vand.u32 %v952, 2147483648
  %v965 = vor.u32 1.1754944e-38, %v964
  %v966 = vsel %vm963, %v965, %v961
  %v967 = vmul.f32 1.0, %v966
  %v968 = vtanh.pop %v948
  %v969 = vmul.f32 %v967, %v849
  %971 = vrot.lane.b32.xlu0 %v968, 96
  %v972 = vpop.permute.xlu0 %971
  %v974 = vmul.f32 %v967, %v972
  %976 = vrot.lane.b32.xlu0 %v974, 16
  %v977 = vpop.permute.xlu0 %976
  %v979 = vadd.f32 %v969, %v977
  %v980 = vtanh.pop %v979
  %982 = vrot.lane.b32.xlu0 %v980, 32
  %v983 = vpop.permute.xlu0 %982
  %v985 = vmul.f32 %v967, %v983
  %987 = vrot.lane.b32.xlu0 %v922, 16
  %v988 = vpop.permute.xlu0 %987
  %v989 = vsel %vm342, %v988, 0
  %991 = vmatpush.msra.mxu0 0.0
  %992 = vmatpush.msra.mxu0 0.0
  %993 = vmatpush.msra.mxu0 0.0
  %994 = vmatpush.msra.mxu0 0.0
  %995 = vmatpush.msra.mxu0 0.0
  %996 = vmatpush.msra.mxu0 0.0
  %997 = vmatpush.msra.mxu0 0.0
  %998 = vmatpush.msra.mxu0 0.0
  %999 = vmatpush.msra.mxu0 0.0
  %1000 = vmatpush.msra.mxu0 0.0
  %1001 = vmatpush.msra.mxu0 0.0
  %1002 = vmatpush.msra.mxu0 0.0
  %1003 = vmatpush.msra.mxu0 0.0
  %1004 = vmatpush.msra.mxu0 0.0
  %1005 = vmatpush.msra.mxu0 %v669
  %1006 = vmatpush.msra.mxu0 %v668
  %1007 = vmatmul.f32.gmra.mxu0 %v989
  %v1008 = vpop.f32.mrf.mxu0
  %v1009 = vadd.f32 0.0, %v1008
  %1010 = vdwg.mxu0
  %1012 = vrot.lane.b32.xlu0 %v1009, 64
  %v1013 = vpop.permute.xlu0 %1012
  %v1015 = vadd.f32 %v655, %v1013
  %v1016 = vxor.u32 %v1015, 2147483648
  %v1017 = vmul.f32 %v1016, 1.442695
  %v1018 = vpow.pop %v1017
  %v1019 = vadd.f32 %v1018, 1.0
  %v1020 = vrcp.pop %v1019
  %v1021 = vmul.f32 %v1019, %v1020
  %v1022 = vsub.f32 1.0, %v1021
  %v1023 = vmul.f32 %v1020, %v1022
  %v1024 = vadd.f32 %v1020, %v1023
  %vm1025 = vweird.f32 %v1019
  %vm1026 = vweird.f32 %v1020
  %vm1027 = vmor %vm1025, %vm1026
  %v1028 = vsel %vm1027, %v1020, %v1024
  %v1029 = vand.u32 2147483647, %v1019
  %vm1030 = vcmp.eq.f32.partialorder %v1029, 8.507059e+37
  %v1031 = vand.u32 %v1019, 2147483648
  %v1032 = vor.u32 1.1754944e-38, %v1031
  %v1033 = vsel %vm1030, %v1032, %v1028
  %v1034 = vmul.f32 1.0, %v1033
  %v1035 = vtanh.pop %v1015
  %v1036 = vmul.f32 %v1034, %v916
  %1038 = vrot.lane.b32.xlu0 %v1035, 96
  %v1039 = vpop.permute.xlu0 %1038
  %v1041 = vmul.f32 %v1034, %v1039
  %1043 = vrot.lane.b32.xlu0 %v1041, 16
  %v1044 = vpop.permute.xlu0 %1043
  %v1046 = vadd.f32 %v1036, %v1044
  %v1047 = vtanh.pop %v1046
  %1049 = vrot.lane.b32.xlu0 %v1047, 32
  %v1050 = vpop.permute.xlu0 %1049
  %v1052 = vmul.f32 %v1034, %v1050
  %1054 = vrot.lane.b32.xlu0 %v985, 80
  %v1055 = vpop.permute.xlu0 %1054
  %v1056 = vsel %vm342, %v1055, 0
  %1058 = vmatpush.msra.mxu0 0.0
  %1059 = vmatpush.msra.mxu0 0.0
  %1060 = vmatpush.msra.mxu0 0.0
  %1061 = vmatpush.msra.mxu0 0.0
  %1062 = vmatpush.msra.mxu0 0.0
  %1063 = vmatpush.msra.mxu0 0.0
  %1064 = vmatpush.msra.mxu0 0.0
  %1065 = vmatpush.msra.mxu0 0.0
  %1066 = vmatpush.msra.mxu0 0.0
  %1067 = vmatpush.msra.mxu0 0.0
  %1068 = vmatpush.msra.mxu0 0.0
  %1069 = vmatpush.msra.mxu0 0.0
  %1070 = vmatpush.msra.mxu0 0.0
  %1071 = vmatpush.msra.mxu0 0.0
  %1072 = vmatpush.msra.mxu0 %v667
  %1073 = vmatpush.msra.mxu0 %v666
  %1074 = vmatmul.f32.gmra.mxu0 %v1056
  %v1075 = vpop.f32.mrf.mxu0
  %v1076 = vadd.f32 0.0, %v1075
  %1077 = vdwg.mxu0
  %v1078 = vadd.f32 %v645, %v1076
  %v1079 = vxor.u32 %v1078, 2147483648
  %v1080 = vmul.f32 %v1079, 1.442695
  %v1081 = vpow.pop %v1080
  %v1082 = vadd.f32 %v1081, 1.0
  %v1083 = vrcp.pop %v1082
  %v1084 = vmul.f32 %v1082, %v1083
  %v1085 = vsub.f32 1.0, %v1084
  %v1086 = vmul.f32 %v1083, %v1085
  %v1087 = vadd.f32 %v1083, %v1086
  %vm1088 = vweird.f32 %v1082
  %vm1089 = vweird.f32 %v1083
  %vm1090 = vmor %vm1088, %vm1089
  %v1091 = vsel %vm1090, %v1083, %v1087
  %v1092 = vand.u32 2147483647, %v1082
  %vm1093 = vcmp.eq.f32.partialorder %v1092, 8.507059e+37
  %v1094 = vand.u32 %v1082, 2147483648
  %v1095 = vor.u32 1.1754944e-38, %v1094
  %v1096 = vsel %vm1093, %v1095, %v1091
  %v1097 = vmul.f32 1.0, %v1096
  %v1098 = vtanh.pop %v1078
  %v1099 = vmul.f32 %v1097, %v979
  %1101 = vrot.lane.b32.xlu0 %v1098, 96
  %v1102 = vpop.permute.xlu0 %1101
  %v1104 = vmul.f32 %v1097, %v1102
  %1106 = vrot.lane.b32.xlu0 %v1104, 16
  %v1107 = vpop.permute.xlu0 %1106
  %v1109 = vadd.f32 %v1099, %v1107
  %v1110 = vtanh.pop %v1109
  %1112 = vrot.lane.b32.xlu0 %v1110, 32
  %v1113 = vpop.permute.xlu0 %1112
  %v1115 = vmul.f32 %v1097, %v1113
  %1117 = vrot.lane.b32.xlu0 %v1052, 16
  %v1118 = vpop.permute.xlu0 %1117
  %v1119 = vsel %vm342, %v1118, 0
  %1121 = vmatpush.msra.mxu0 0.0
  %1122 = vmatpush.msra.mxu0 0.0
  %1123 = vmatpush.msra.mxu0 0.0
  %1124 = vmatpush.msra.mxu0 0.0
  %1125 = vmatpush.msra.mxu0 0.0
  %1126 = vmatpush.msra.mxu0 0.0
  %1127 = vmatpush.msra.mxu0 0.0
  %1128 = vmatpush.msra.mxu0 0.0
  %1129 = vmatpush.msra.mxu0 0.0
  %1130 = vmatpush.msra.mxu0 0.0
  %1131 = vmatpush.msra.mxu0 0.0
  %1132 = vmatpush.msra.mxu0 0.0
  %1133 = vmatpush.msra.mxu0 0.0
  %1134 = vmatpush.msra.mxu0 0.0
  %1135 = vmatpush.msra.mxu0 %v669
  %1136 = vmatpush.msra.mxu0 %v668
  %1137 = vmatmul.f32.gmra.mxu0 %v1119
  %v1138 = vpop.f32.mrf.mxu0
  %v1139 = vadd.f32 0.0, %v1138
  %1140 = vdwg.mxu0
  %1142 = vrot.lane.b32.xlu0 %v1139, 64
  %v1143 = vpop.permute.xlu0 %1142
  %v1145 = vadd.f32 %v650, %v1143
  %v1146 = vxor.u32 %v1145, 2147483648
  %v1147 = vmul.f32 %v1146, 1.442695
  %v1148 = vpow.pop %v1147
  %v1149 = vadd.f32 %v1148, 1.0
  %v1150 = vrcp.pop %v1149
  %v1151 = vmul.f32 %v1149, %v1150
  %v1152 = vsub.f32 1.0, %v1151
  %v1153 = vmul.f32 %v1150, %v1152
  %v1154 = vadd.f32 %v1150, %v1153
  %vm1155 = vweird.f32 %v1149
  %vm1156 = vweird.f32 %v1150
  %vm1157 = vmor %vm1155, %vm1156
  %v1158 = vsel %vm1157, %v1150, %v1154
  %v1159 = vand.u32 2147483647, %v1149
  %vm1160 = vcmp.eq.f32.partialorder %v1159, 8.507059e+37
  %v1161 = vand.u32 %v1149, 2147483648
  %v1162 = vor.u32 1.1754944e-38, %v1161
  %v1163 = vsel %vm1160, %v1162, %v1158
  %v1164 = vmul.f32 1.0, %v1163
  %v1165 = vtanh.pop %v1145
  %v1166 = vmul.f32 %v1164, %v1046
  %1168 = vrot.lane.b32.xlu0 %v1165, 96
  %v1169 = vpop.permute.xlu0 %1168
  %v1171 = vmul.f32 %v1164, %v1169
  %1173 = vrot.lane.b32.xlu0 %v1171, 16
  %v1174 = vpop.permute.xlu0 %1173
  %v1176 = vadd.f32 %v1166, %v1174
  %v1177 = vtanh.pop %v1176
  %1179 = vrot.lane.b32.xlu0 %v1177, 32
  %v1180 = vpop.permute.xlu0 %1179
  %v1182 = vmul.f32 %v1164, %v1180
  %1184 = vrot.lane.b32.xlu0 %v1115, 80
  %v1185 = vpop.permute.xlu0 %1184
  %v1186 = vsel %vm342, %v1185, 0
  %1188 = vmatpush.msra.mxu0 0.0
  %1189 = vmatpush.msra.mxu0 0.0
  %1190 = vmatpush.msra.mxu0 0.0
  %1191 = vmatpush.msra.mxu0 0.0
  %1192 = vmatpush.msra.mxu0 0.0
  %1193 = vmatpush.msra.mxu0 0.0
  %1194 = vmatpush.msra.mxu0 0.0
  %1195 = vmatpush.msra.mxu0 0.0
  %1196 = vmatpush.msra.mxu0 0.0
  %1197 = vmatpush.msra.mxu0 0.0
  %1198 = vmatpush.msra.mxu0 0.0
  %1199 = vmatpush.msra.mxu0 0.0
  %1200 = vmatpush.msra.mxu0 0.0
  %1201 = vmatpush.msra.mxu0 0.0
  %1202 = vmatpush.msra.mxu0 %v667
  %1203 = vmatpush.msra.mxu0 %v666
  %1204 = vmatmul.f32.gmra.mxu0 %v1186
  %v1205 = vpop.f32.mrf.mxu0
  %v1206 = vadd.f32 0.0, %v1205
  %1207 = vdwg.mxu0
  %v1208 = vadd.f32 %v650, %v1206
  %v1209 = vxor.u32 %v1208, 2147483648
  %v1210 = vmul.f32 %v1209, 1.442695
  %v1211 = vpow.pop %v1210
  %v1212 = vadd.f32 %v1211, 1.0
  %v1213 = vrcp.pop %v1212
  %v1214 = vmul.f32 %v1212, %v1213
  %v1215 = vsub.f32 1.0, %v1214
  %v1216 = vmul.f32 %v1213, %v1215
  %v1217 = vadd.f32 %v1213, %v1216
  %vm1218 = vweird.f32 %v1212
  %vm1219 = vweird.f32 %v1213
  %vm1220 = vmor %vm1218, %vm1219
  %v1221 = vsel %vm1220, %v1213, %v1217
  %v1222 = vand.u32 2147483647, %v1212
  %vm1223 = vcmp.eq.f32.partialorder %v1222, 8.507059e+37
  %v1224 = vand.u32 %v1212, 2147483648
  %v1225 = vor.u32 1.1754944e-38, %v1224
  %v1226 = vsel %vm1223, %v1225, %v1221
  %v1227 = vmul.f32 1.0, %v1226
  %v1228 = vtanh.pop %v1208
  %v1229 = vmul.f32 %v1227, %v1109
  %1231 = vrot.lane.b32.xlu0 %v1228, 96
  %v1232 = vpop.permute.xlu0 %1231
  %v1234 = vmul.f32 %v1227, %v1232
  %1236 = vrot.lane.b32.xlu0 %v1234, 16
  %v1237 = vpop.permute.xlu0 %1236
  %v1239 = vadd.f32 %v1229, %v1237
  %v1240 = vtanh.pop %v1239
  %1242 = vrot.lane.b32.xlu0 %v1240, 32
  %v1243 = vpop.permute.xlu0 %1242
  %v1245 = vmul.f32 %v1227, %v1243
  %1247 = vrot.lane.b32.xlu0 %v1182, 16
  %v1248 = vpop.permute.xlu0 %1247
  %v1249 = vsel %vm342, %v1248, 0
  %1251 = vmatpush.msra.mxu0 0.0
  %1252 = vmatpush.msra.mxu0 0.0
  %1253 = vmatpush.msra.mxu0 0.0
  %1254 = vmatpush.msra.mxu0 0.0
  %1255 = vmatpush.msra.mxu0 0.0
  %1256 = vmatpush.msra.mxu0 0.0
  %1257 = vmatpush.msra.mxu0 0.0
  %1258 = vmatpush.msra.mxu0 0.0
  %1259 = vmatpush.msra.mxu0 0.0
  %1260 = vmatpush.msra.mxu0 0.0
  %1261 = vmatpush.msra.mxu0 0.0
  %1262 = vmatpush.msra.mxu0 0.0
  %1263 = vmatpush.msra.mxu0 0.0
  %1264 = vmatpush.msra.mxu0 0.0
  %1265 = vmatpush.msra.mxu0 %v669
  %1266 = vmatpush.msra.mxu0 %v668
  %1267 = vmatmul.f32.gmra.mxu0 %v1249
  %v1268 = vpop.f32.mrf.mxu0
  %v1269 = vadd.f32 0.0, %v1268
  %1270 = vdwg.mxu0
  %1272 = vrot.lane.b32.xlu0 %v1269, 64
  %v1273 = vpop.permute.xlu0 %1272
  %v1275 = vadd.f32 %v645, %v1273
  %v1276 = vxor.u32 %v1275, 2147483648
  %v1277 = vmul.f32 %v1276, 1.442695
  %v1278 = vpow.pop %v1277
  %v1279 = vadd.f32 %v1278, 1.0
  %v1280 = vrcp.pop %v1279
  %v1281 = vmul.f32 %v1279, %v1280
  %v1282 = vsub.f32 1.0, %v1281
  %v1283 = vmul.f32 %v1280, %v1282
  %v1284 = vadd.f32 %v1280, %v1283
  %vm1285 = vweird.f32 %v1279
  %vm1286 = vweird.f32 %v1280
  %vm1287 = vmor %vm1285, %vm1286
  %v1288 = vsel %vm1287, %v1280, %v1284
  %v1289 = vand.u32 2147483647, %v1279
  %vm1290 = vcmp.eq.f32.partialorder %v1289, 8.507059e+37
  %v1291 = vand.u32 %v1279, 2147483648
  %v1292 = vor.u32 1.1754944e-38, %v1291
  %v1293 = vsel %vm1290, %v1292, %v1288
  %v1294 = vmul.f32 1.0, %v1293
  %v1295 = vtanh.pop %v1275
  %v1296 = vmul.f32 %v1294, %v1176
  %1298 = vrot.lane.b32.xlu0 %v1295, 96
  %v1299 = vpop.permute.xlu0 %1298
  %v1301 = vmul.f32 %v1294, %v1299
  %1303 = vrot.lane.b32.xlu0 %v1301, 16
  %v1304 = vpop.permute.xlu0 %1303
  %v1306 = vadd.f32 %v1296, %v1304
  %v1307 = vtanh.pop %v1306
  %1309 = vrot.lane.b32.xlu0 %v1307, 32
  %v1310 = vpop.permute.xlu0 %1309
  %v1312 = vmul.f32 %v1294, %v1310
  %1314 = vrot.lane.b32.xlu0 %v1245, 80
  %v1315 = vpop.permute.xlu0 %1314
  %v1316 = vsel %vm342, %v1315, 0
  %1318 = vmatpush.msra.mxu0 0.0
  %1319 = vmatpush.msra.mxu0 0.0
  %1320 = vmatpush.msra.mxu0 0.0
  %1321 = vmatpush.msra.mxu0 0.0
  %1322 = vmatpush.msra.mxu0 0.0
  %1323 = vmatpush.msra.mxu0 0.0
  %1324 = vmatpush.msra.mxu0 0.0
  %1325 = vmatpush.msra.mxu0 0.0
  %1326 = vmatpush.msra.mxu0 0.0
  %1327 = vmatpush.msra.mxu0 0.0
  %1328 = vmatpush.msra.mxu0 0.0
  %1329 = vmatpush.msra.mxu0 0.0
  %1330 = vmatpush.msra.mxu0 0.0
  %1331 = vmatpush.msra.mxu0 0.0
  %1332 = vmatpush.msra.mxu0 %v667
  %1333 = vmatpush.msra.mxu0 %v666
  %1334 = vmatmul.f32.gmra.mxu0 %v1316
  %v1335 = vpop.f32.mrf.mxu0
  %v1336 = vadd.f32 0.0, %v1335
  %1337 = vdwg.mxu0
  %v1338 = vadd.f32 %v655, %v1336
  %v1339 = vxor.u32 %v1338, 2147483648
  %v1340 = vmul.f32 %v1339, 1.442695
  %v1341 = vpow.pop %v1340
  %v1342 = vadd.f32 %v1341, 1.0
  %v1343 = vrcp.pop %v1342
  %v1344 = vmul.f32 %v1342, %v1343
  %v1345 = vsub.f32 1.0, %v1344
  %v1346 = vmul.f32 %v1343, %v1345
  %v1347 = vadd.f32 %v1343, %v1346
  %vm1348 = vweird.f32 %v1342
  %vm1349 = vweird.f32 %v1343
  %vm1350 = vmor %vm1348, %vm1349
  %v1351 = vsel %vm1350, %v1343, %v1347
  %v1352 = vand.u32 2147483647, %v1342
  %vm1353 = vcmp.eq.f32.partialorder %v1352, 8.507059e+37
  %v1354 = vand.u32 %v1342, 2147483648
  %v1355 = vor.u32 1.1754944e-38, %v1354
  %v1356 = vsel %vm1353, %v1355, %v1351
  %v1357 = vmul.f32 1.0, %v1356
  %v1358 = vtanh.pop %v1338
  %v1359 = vmul.f32 %v1357, %v1239
  %1361 = vrot.lane.b32.xlu0 %v1358, 96
  %v1362 = vpop.permute.xlu0 %1361
  %v1364 = vmul.f32 %v1357, %v1362
  %1366 = vrot.lane.b32.xlu0 %v1364, 16
  %v1367 = vpop.permute.xlu0 %1366
  %v1369 = vadd.f32 %v1359, %v1367
  %v1370 = vtanh.pop %v1369
  %1372 = vrot.lane.b32.xlu0 %v1370, 32
  %v1373 = vpop.permute.xlu0 %1372
  %v1375 = vmul.f32 %v1357, %v1373
  %1377 = vrot.lane.b32.xlu0 %v1312, 16
  %v1378 = vpop.permute.xlu0 %1377
  %v1379 = vsel %vm342, %v1378, 0
  %1381 = vmatpush.msra.mxu0 0.0
  %1382 = vmatpush.msra.mxu0 0.0
  %1383 = vmatpush.msra.mxu0 0.0
  %1384 = vmatpush.msra.mxu0 0.0
  %1385 = vmatpush.msra.mxu0 0.0
  %1386 = vmatpush.msra.mxu0 0.0
  %1387 = vmatpush.msra.mxu0 0.0
  %1388 = vmatpush.msra.mxu0 0.0
  %1389 = vmatpush.msra.mxu0 0.0
  %1390 = vmatpush.msra.mxu0 0.0
  %1391 = vmatpush.msra.mxu0 0.0
  %1392 = vmatpush.msra.mxu0 0.0
  %1393 = vmatpush.msra.mxu0 0.0
  %1394 = vmatpush.msra.mxu0 0.0
  %1395 = vmatpush.msra.mxu0 %v669
  %1396 = vmatpush.msra.mxu0 %v668
  %1397 = vmatmul.f32.gmra.mxu0 %v1379
  %v1398 = vpop.f32.mrf.mxu0
  %v1399 = vadd.f32 0.0, %v1398
  %1400 = vdwg.mxu0
  %1402 = vrot.lane.b32.xlu0 %v1399, 64
  %v1403 = vpop.permute.xlu0 %1402
  %v1405 = vadd.f32 %v640, %v1403
  %v1406 = vxor.u32 %v1405, 2147483648
  %v1407 = vmul.f32 %v1406, 1.442695
  %v1408 = vpow.pop %v1407
  %v1409 = vadd.f32 %v1408, 1.0
  %v1410 = vrcp.pop %v1409
  %v1411 = vmul.f32 %v1409, %v1410
  %v1412 = vsub.f32 1.0, %v1411
  %v1413 = vmul.f32 %v1410, %v1412
  %v1414 = vadd.f32 %v1410, %v1413
  %vm1415 = vweird.f32 %v1409
  %vm1416 = vweird.f32 %v1410
  %vm1417 = vmor %vm1415, %vm1416
  %v1418 = vsel %vm1417, %v1410, %v1414
  %v1419 = vand.u32 2147483647, %v1409
  %vm1420 = vcmp.eq.f32.partialorder %v1419, 8.507059e+37
  %v1421 = vand.u32 %v1409, 2147483648
  %v1422 = vor.u32 1.1754944e-38, %v1421
  %v1423 = vsel %vm1420, %v1422, %v1418
  %v1424 = vmul.f32 1.0, %v1423
  %v1425 = vtanh.pop %v1405
  %v1426 = vmul.f32 %v1424, %v1306
  %1428 = vrot.lane.b32.xlu0 %v1425, 96
  %v1429 = vpop.permute.xlu0 %1428
  %v1431 = vmul.f32 %v1424, %v1429
  %1433 = vrot.lane.b32.xlu0 %v1431, 16
  %v1434 = vpop.permute.xlu0 %1433
  %v1436 = vadd.f32 %v1426, %v1434
  %v1437 = vtanh.pop %v1436
  %1439 = vrot.lane.b32.xlu0 %v1437, 32
  %v1440 = vpop.permute.xlu0 %1439
  %v1442 = vmul.f32 %v1424, %v1440
  %1444 = vrot.lane.b32.xlu0 %v1375, 80
  %v1445 = vpop.permute.xlu0 %1444
  %v1446 = vsel %vm342, %v1445, 0
  %1448 = vmatpush.msra.mxu0 0.0
  %1449 = vmatpush.msra.mxu0 0.0
  %1450 = vmatpush.msra.mxu0 0.0
  %1451 = vmatpush.msra.mxu0 0.0
  %1452 = vmatpush.msra.mxu0 0.0
  %1453 = vmatpush.msra.mxu0 0.0
  %1454 = vmatpush.msra.mxu0 0.0
  %1455 = vmatpush.msra.mxu0 0.0
  %1456 = vmatpush.msra.mxu0 0.0
  %1457 = vmatpush.msra.mxu0 0.0
  %1458 = vmatpush.msra.mxu0 0.0
  %1459 = vmatpush.msra.mxu0 0.0
  %1460 = vmatpush.msra.mxu0 0.0
  %1461 = vmatpush.msra.mxu0 0.0
  %1462 = vmatpush.msra.mxu0 %v667
  %1463 = vmatpush.msra.mxu0 %v666
  %1464 = vmatmul.f32.gmra.mxu0 %v1446
  %v1465 = vpop.f32.mrf.mxu0
  %v1466 = vadd.f32 0.0, %v1465
  %1467 = vdwg.mxu0
  %v1468 = vadd.f32 %v660, %v1466
  %v1469 = vxor.u32 %v1468, 2147483648
  %v1470 = vmul.f32 %v1469, 1.442695
  %v1471 = vpow.pop %v1470
  %v1472 = vadd.f32 %v1471, 1.0
  %v1473 = vrcp.pop %v1472
  %v1474 = vmul.f32 %v1472, %v1473
  %v1475 = vsub.f32 1.0, %v1474
  %v1476 = vmul.f32 %v1473, %v1475
  %v1477 = vadd.f32 %v1473, %v1476
  %vm1478 = vweird.f32 %v1472
  %vm1479 = vweird.f32 %v1473
  %vm1480 = vmor %vm1478, %vm1479
  %v1481 = vsel %vm1480, %v1473, %v1477
  %v1482 = vand.u32 2147483647, %v1472
  %vm1483 = vcmp.eq.f32.partialorder %v1482, 8.507059e+37
  %v1484 = vand.u32 %v1472, 2147483648
  %v1485 = vor.u32 1.1754944e-38, %v1484
  %v1486 = vsel %vm1483, %v1485, %v1481
  %v1487 = vmul.f32 1.0, %v1486
  %v1488 = vtanh.pop %v1468
  %v1489 = vmul.f32 %v1487, %v1369
  %1491 = vrot.lane.b32.xlu0 %v1488, 96
  %v1492 = vpop.permute.xlu0 %1491
  %v1494 = vmul.f32 %v1487, %v1492
  %1496 = vrot.lane.b32.xlu0 %v1494, 16
  %v1497 = vpop.permute.xlu0 %1496
  %v1499 = vadd.f32 %v1489, %v1497
  %v1500 = vtanh.pop %v1499
  %1502 = vrot.lane.b32.xlu0 %v1500, 32
  %v1503 = vpop.permute.xlu0 %1502
  %v1505 = vmul.f32 %v1487, %v1503
  %1507 = vrot.lane.b32.xlu0 %v1442, 16
  %v1508 = vpop.permute.xlu0 %1507
  %v1509 = vsel %vm342, %v1508, 0
  %1511 = vmatpush.msra.mxu0 0.0
  %1512 = vmatpush.msra.mxu0 0.0
  %1513 = vmatpush.msra.mxu0 0.0
  %1514 = vmatpush.msra.mxu0 0.0
  %1515 = vmatpush.msra.mxu0 0.0
  %1516 = vmatpush.msra.mxu0 0.0
  %1517 = vmatpush.msra.mxu0 0.0
  %1518 = vmatpush.msra.mxu0 0.0
  %1519 = vmatpush.msra.mxu0 0.0
  %1520 = vmatpush.msra.mxu0 0.0
  %1521 = vmatpush.msra.mxu0 0.0
  %1522 = vmatpush.msra.mxu0 0.0
  %1523 = vmatpush.msra.mxu0 0.0
  %1524 = vmatpush.msra.mxu0 0.0
  %1525 = vmatpush.msra.mxu0 %v669
  %1526 = vmatpush.msra.mxu0 %v668
  %1527 = vmatmul.f32.gmra.mxu0 %v1509
  %v1528 = vpop.f32.mrf.mxu0
  %v1529 = vadd.f32 0.0, %v1528
  %1530 = vdwg.mxu0
  %1532 = vrot.lane.b32.xlu0 %v1529, 64
  %v1533 = vpop.permute.xlu0 %1532
  %v1535 = vadd.f32 %v635, %v1533
  %v1536 = vxor.u32 %v1535, 2147483648
  %v1537 = vmul.f32 %v1536, 1.442695
  %v1538 = vpow.pop %v1537
  %v1539 = vadd.f32 %v1538, 1.0
  %v1540 = vrcp.pop %v1539
  %v1541 = vmul.f32 %v1539, %v1540
  %v1542 = vsub.f32 1.0, %v1541
  %v1543 = vmul.f32 %v1540, %v1542
  %v1544 = vadd.f32 %v1540, %v1543
  %vm1545 = vweird.f32 %v1539
  %vm1546 = vweird.f32 %v1540
  %vm1547 = vmor %vm1545, %vm1546
  %v1548 = vsel %vm1547, %v1540, %v1544
  %v1549 = vand.u32 2147483647, %v1539
  %vm1550 = vcmp.eq.f32.partialorder %v1549, 8.507059e+37
  %v1551 = vand.u32 %v1539, 2147483648
  %v1552 = vor.u32 1.1754944e-38, %v1551
  %v1553 = vsel %vm1550, %v1552, %v1548
  %v1554 = vmul.f32 1.0, %v1553
  %v1555 = vtanh.pop %v1535
  %v1556 = vmul.f32 %v1554, %v1436
  %1558 = vrot.lane.b32.xlu0 %v1555, 96
  %v1559 = vpop.permute.xlu0 %1558
  %v1561 = vmul.f32 %v1554, %v1559
  %1563 = vrot.lane.b32.xlu0 %v1561, 16
  %v1564 = vpop.permute.xlu0 %1563
  %v1566 = vadd.f32 %v1556, %v1564
  %v1567 = vtanh.pop %v1566
  %1569 = vrot.lane.b32.xlu0 %v1567, 32
  %v1570 = vpop.permute.xlu0 %1569
  %v1572 = vmul.f32 %v1554, %v1570
  %1574 = vrot.lane.b32.xlu0 %v1505, 80
  %v1575 = vpop.permute.xlu0 %1574
  %v1576 = vsel %vm342, %v1575, 0
  %1578 = vmatpush.msra.mxu0 0.0
  %1579 = vmatpush.msra.mxu0 0.0
  %1580 = vmatpush.msra.mxu0 0.0
  %1581 = vmatpush.msra.mxu0 0.0
  %1582 = vmatpush.msra.mxu0 0.0
  %1583 = vmatpush.msra.mxu0 0.0
  %1584 = vmatpush.msra.mxu0 0.0
  %1585 = vmatpush.msra.mxu0 0.0
  %1586 = vmatpush.msra.mxu0 0.0
  %1587 = vmatpush.msra.mxu0 0.0
  %1588 = vmatpush.msra.mxu0 0.0
  %1589 = vmatpush.msra.mxu0 0.0
  %1590 = vmatpush.msra.mxu0 0.0
  %1591 = vmatpush.msra.mxu0 0.0
  %1592 = vmatpush.msra.mxu0 %v667
  %1593 = vmatpush.msra.mxu0 %v666
  %1594 = vmatmul.f32.gmra.mxu0 %v1576
  %v1595 = vpop.f32.mrf.mxu0
  %v1596 = vadd.f32 0.0, %v1595
  %1597 = vdwg.mxu0
  %v1598 = vadd.f32 %v665, %v1596
  %v1599 = vxor.u32 %v1598, 2147483648
  %v1600 = vmul.f32 %v1599, 1.442695
  %v1601 = vpow.pop %v1600
  %v1602 = vadd.f32 %v1601, 1.0
  %v1603 = vrcp.pop %v1602
  %v1604 = vmul.f32 %v1602, %v1603
  %v1605 = vsub.f32 1.0, %v1604
  %v1606 = vmul.f32 %v1603, %v1605
  %v1607 = vadd.f32 %v1603, %v1606
  %vm1608 = vweird.f32 %v1602
  %vm1609 = vweird.f32 %v1603
  %vm1610 = vmor %vm1608, %vm1609
  %v1611 = vsel %vm1610, %v1603, %v1607
  %v1612 = vand.u32 2147483647, %v1602
  %vm1613 = vcmp.eq.f32.partialorder %v1612, 8.507059e+37
  %v1614 = vand.u32 %v1602, 2147483648
  %v1615 = vor.u32 1.1754944e-38, %v1614
  %v1616 = vsel %vm1613, %v1615, %v1611
  %v1617 = vmul.f32 1.0, %v1616
  %v1618 = vtanh.pop %v1598
  %v1619 = vmul.f32 %v1617, %v1499
  %1621 = vrot.lane.b32.xlu0 %v1618, 96
  %v1622 = vpop.permute.xlu0 %1621
  %v1624 = vmul.f32 %v1617, %v1622
  %1626 = vrot.lane.b32.xlu0 %v1624, 16
  %v1627 = vpop.permute.xlu0 %1626
  %v1629 = vadd.f32 %v1619, %v1627
  %v1630 = vtanh.pop %v1629
  %1632 = vrot.lane.b32.xlu0 %v1630, 32
  %v1633 = vpop.permute.xlu0 %1632
  %v1635 = vmul.f32 %v1617, %v1633
  %1637 = vrot.lane.b32.xlu0 %v1572, 16
  %v1638 = vpop.permute.xlu0 %1637
  %v1639 = vsel %vm342, %v1638, 0
  %1641 = vmatpush.msra.mxu0 0.0
  %1642 = vmatpush.msra.mxu0 0.0
  %1643 = vmatpush.msra.mxu0 0.0
  %1644 = vmatpush.msra.mxu0 0.0
  %1645 = vmatpush.msra.mxu0 0.0
  %1646 = vmatpush.msra.mxu0 0.0
  %1647 = vmatpush.msra.mxu0 0.0
  %1648 = vmatpush.msra.mxu0 0.0
  %1649 = vmatpush.msra.mxu0 0.0
  %1650 = vmatpush.msra.mxu0 0.0
  %1651 = vmatpush.msra.mxu0 0.0
  %1652 = vmatpush.msra.mxu0 0.0
  %1653 = vmatpush.msra.mxu0 0.0
  %1654 = vmatpush.msra.mxu0 0.0
  %1655 = vmatpush.msra.mxu0 %v669
  %1656 = vmatpush.msra.mxu0 %v668
  %1657 = vmatmul.f32.gmra.mxu0 %v1639
  %v1658 = vpop.f32.mrf.mxu0
  %v1659 = vadd.f32 0.0, %v1658
  %1660 = vdwg.mxu0
  %1662 = vrot.lane.b32.xlu0 %v1659, 64
  %v1663 = vpop.permute.xlu0 %1662
  %v1665 = vadd.f32 %v631, %v1663
  %v1666 = vxor.u32 %v1665, 2147483648
  %v1667 = vmul.f32 %v1666, 1.442695
  %v1668 = vpow.pop %v1667
  %v1669 = vadd.f32 %v1668, 1.0
  %v1670 = vrcp.pop %v1669
  %v1671 = vmul.f32 %v1669, %v1670
  %v1672 = vsub.f32 1.0, %v1671
  %v1673 = vmul.f32 %v1670, %v1672
  %v1674 = vadd.f32 %v1670, %v1673
  %vm1675 = vweird.f32 %v1669
  %vm1676 = vweird.f32 %v1670
  %vm1677 = vmor %vm1675, %vm1676
  %v1678 = vsel %vm1677, %v1670, %v1674
  %v1679 = vand.u32 2147483647, %v1669
  %vm1680 = vcmp.eq.f32.partialorder %v1679, 8.507059e+37
  %v1681 = vand.u32 %v1669, 2147483648
  %v1682 = vor.u32 1.1754944e-38, %v1681
  %v1683 = vsel %vm1680, %v1682, %v1678
  %v1684 = vmul.f32 1.0, %v1683
  %v1685 = vtanh.pop %v1665
  %v1686 = vmul.f32 %v1684, %v1566
  %1688 = vrot.lane.b32.xlu0 %v1685, 96
  %v1689 = vpop.permute.xlu0 %1688
  %v1691 = vmul.f32 %v1684, %v1689
  %1693 = vrot.lane.b32.xlu0 %v1691, 16
  %v1694 = vpop.permute.xlu0 %1693
  %v1696 = vadd.f32 %v1686, %v1694
  %v1697 = vtanh.pop %v1696
  %1699 = vrot.lane.b32.xlu0 %v1697, 32
  %v1700 = vpop.permute.xlu0 %1699
  %v1702 = vmul.f32 %v1684, %v1700
  %1705 = vrot.lane.b32.xlu0 %v1702, 32
  %v1706 = vpop.permute.xlu0 %1705
  %v1708 = vsel %vm342, %v795, %v1706
  %1710 = vrot.lane.b32.xlu0 %v1572, 32
  %v1711 = vpop.permute.xlu0 %1710
  %v1713 = vsel %vm342, %v925, %v1711
  %1715 = vrot.lane.b32.xlu0 %v1442, 32
  %v1716 = vpop.permute.xlu0 %1715
  %v1718 = vsel %vm342, %v1055, %v1716
  %1720 = vrot.lane.b32.xlu0 %v1312, 32
  %v1721 = vpop.permute.xlu0 %1720
  %v1723 = vsel %vm342, %v1185, %v1721
  %1725 = vrot.lane.b32.xlu0 %v1182, 32
  %v1726 = vpop.permute.xlu0 %1725
  %v1728 = vsel %vm342, %v1315, %v1726
  %1730 = vrot.lane.b32.xlu0 %v1052, 32
  %v1731 = vpop.permute.xlu0 %1730
  %v1733 = vsel %vm342, %v1445, %v1731
  %1735 = vrot.lane.b32.xlu0 %v922, 32
  %v1736 = vpop.permute.xlu0 %1735
  %v1738 = vsel %vm342, %v1575, %v1736
  %1740 = vrot.lane.b32.xlu0 %v1635, 80
  %v1741 = vpop.permute.xlu0 %1740
  %1743 = vrot.lane.b32.xlu0 %v792, 32
  %v1744 = vpop.permute.xlu0 %1743
  %v1746 = vsel %vm342, %v1741, %v1744
  %v1748 = vrot.slane %v1713, 6
  %v1751 = vrot.slane %v1718, 4
  %v1754 = vrot.slane %v1723, 2
  %v1757 = vrot.slane %v1733, 6
  %v1760 = vrot.slane %v1738, 4
  %v1763 = vrot.slane %v1746, 2
  %vm1765 = vcmask 1041408
  %v1766 = vsel %vm1765, %v1708, %v1748
  %vm1767 = vcmask 1043456
  %v1768 = vsel %vm1767, %v1766, %v1751
  %vm1769 = vcmask 1045504
  %v1770 = vsel %vm1769, %v1768, %v1754
  %v1771 = vsel %vm1765, %v1728, %v1757
  %v1772 = vsel %vm1767, %v1771, %v1760
  %v1773 = vsel %vm1769, %v1772, %v1763
  %v1774 = vld [vmem:[%s21] sm:$0x1]
  %v1775 = vld [vmem:[%s22] sm:$0x1]
  %v1776 = vsel %vm171, %v1770, 0.0
  %1777 = vadd.xlane.f32.xlu0 %v1776
  %v1778 = vpop.xlane.xlu0 %1777
  %v1779 = vsel %vm171, %v1773, 0.0
  %1780 = vadd.xlane.f32.xlu0 %v1779
  %v1781 = vpop.xlane.xlu0 %1780
  %v1782 = vmul.f32 %v1778, %v407
  %v1783 = vmul.f32 %v1781, %v407
  %v1784 = vsub.f32 %v1770, %v1782
  %v1785 = vsub.f32 %v1773, %v1783
  %v1786 = vmul.f32 %v1784, %v1784
  %v1787 = vmul.f32 %v1785, %v1785
  %v1788 = vsel %vm171, %v1786, 0.0
  %1789 = vadd.xlane.f32.xlu0 %v1788
  %v1790 = vpop.xlane.xlu0 %1789
  %v1791 = vsel %vm171, %v1787, 0.0
  %1792 = vadd.xlane.f32.xlu0 %v1791
  %v1793 = vpop.xlane.xlu0 %1792
  %v1794 = vmul.f32 %v1790, %v407
  %v1795 = vmul.f32 %v1793, %v407
  %v1796 = vadd.f32 %v1794, 1e-05
  %v1797 = vadd.f32 %v1795, 1e-05
  %v1798 = vrsqrt.pop %v1796
  %v1799 = vmul.f32 %v1798, %v1796
  %v1800 = vmul.f32 %v1799, %v1798
  %v1801 = vmul.f32 0.5, %v1800
  %v1802 = vsub.f32 1.5, %v1801
  %v1803 = vmul.f32 %v1798, %v1802
  %vm1804 = vweird.f32 %v1796
  %vm1805 = vweird.f32 %v1798
  %vm1806 = vmor %vm1804, %vm1805
  %v1807 = vsel %vm1806, %v1798, %v1803
  %v1808 = vrsqrt.pop %v1797
  %v1809 = vmul.f32 %v1808, %v1797
  %v1810 = vmul.f32 %v1809, %v1808
  %v1811 = vmul.f32 0.5, %v1810
  %v1812 = vsub.f32 1.5, %v1811
  %v1813 = vmul.f32 %v1808, %v1812
  %vm1814 = vweird.f32 %v1797
  %vm1815 = vweird.f32 %v1808
  %vm1816 = vmor %vm1814, %vm1815
  %v1817 = vsel %vm1816, %v1808, %v1813
  %v1818 = vmul.f32 %v1784, %v1807
  %v1819 = vmul.f32 %v1785, %v1817
  %v1821 = vperm.slane %v1774, 0
  %v1823 = vmul.f32 %v1818, %v1821
  %v1824 = vmul.f32 %v1819, %v1821
  %v1826 = vperm.slane %v1775, 0
  %v1828 = vadd.f32 %v1823, %v1826
  %v1829 = vadd.f32 %v1824, %v1826
  %v1830 = vld [vmem:[%s23] sm:$0xff]
  %v1831 = vld [vmem:[%s23 + $0x8] sm:$0xff]
  %v1832 = vld [vmem:[%s23 + $0x10] sm:$0xff]
  %v1833 = vld [vmem:[%s23 + $0x18] sm:$0xff]
  %v1834 = vld [vmem:[%s24] sm:$0x1]
  %v1836 = vperm.slane %v1834, 0
  %v1839 = vsel %vm171, %v1828, 0
  %v1842 = vsel %vm171, %v1829, 0
  %1844 = vmatpush.msra.mxu0 0.0
  %1845 = vmatpush.msra.mxu0 0.0
  %1846 = vmatpush.msra.mxu0 0.0
  %1847 = vmatpush.msra.mxu0 0.0
  %1848 = vmatpush.msra.mxu0 0.0
  %1849 = vmatpush.msra.mxu0 0.0
  %1850 = vmatpush.msra.mxu0 0.0
  %1851 = vmatpush.msra.mxu0 0.0
  %1852 = vmatpush.msra.mxu0 0.0
  %1853 = vmatpush.msra.mxu0 0.0
  %1854 = vmatpush.msra.mxu0 0.0
  %1855 = vmatpush.msra.mxu0 0.0
  %1856 = vmatpush.msra.mxu0 %v1833
  %1857 = vmatpush.msra.mxu0 %v1832
  %1858 = vmatpush.msra.mxu0 %v1831
  %1859 = vmatpush.msra.mxu0 %v1830
  %1860 = vmatmul.f32.gmra.mxu0 %v1839
  %v1861 = vpop.f32.mrf.mxu0
  %v1862 = vadd.f32 %v1836, %v1861
  %1863 = vmatmul.f32.gmra.mxu0 %v1842
  %v1864 = vpop.f32.mrf.mxu0
  %v1865 = vadd.f32 %v1836, %v1864
  %1866 = vdwg.mxu0
  %1867 = vst [vmem:[%s25] sm:$0x3] %v1862
  %1869 = vst.sshfl [vmem:[#allocation1] sm:$0xff pattern:$0x73625140] %v1862
  %s1870 = scalar_lea.vmem [#allocation1], 1
  %v1871 = vld [vmem:[%s1870] ss:$4 sm:$0xff]
  %1873 = vst [vmem:[%s25 + $0x2] sm:$0x3] %v1871
  %1874 = vst.sshfl [vmem:[#allocation1] sm:$0xff pattern:$0x73625140] %v1862
  %s1875 = scalar_lea.vmem [#allocation1], 2
  %v1876 = vld [vmem:[%s1875] ss:$4 sm:$0xff]
  %1878 = vst [vmem:[%s25 + $0x4] sm:$0x3] %v1876
  %1879 = vst.sshfl [vmem:[#allocation1] sm:$0xff pattern:$0x73625140] %v1862
  %s1880 = scalar_lea.vmem [#allocation1], 3
  %v1881 = vld [vmem:[%s1880] ss:$4 sm:$0xff]
  %1883 = vst [vmem:[%s25 + $0x6] sm:$0x3] %v1881
  %1884 = vst [vmem:[%s25 + $0x8] sm:$0x3] %v1865
  %1886 = vst.sshfl [vmem:[#allocation1] sm:$0xff pattern:$0x73625140] %v1865
  %s1887 = scalar_lea.vmem [#allocation1], 1
  %v1888 = vld [vmem:[%s1887] ss:$4 sm:$0xff]
  %1890 = vst [vmem:[%s25 + $0xa] sm:$0x3] %v1888
  %1891 = vst.sshfl [vmem:[#allocation1] sm:$0xff pattern:$0x73625140] %v1865
  %s1892 = scalar_lea.vmem [#allocation1], 2
  %v1893 = vld [vmem:[%s1892] ss:$4 sm:$0xff]
  %1895 = vst [vmem:[%s25 + $0xc] sm:$0x3] %v1893
  %1896 = vst.sshfl [vmem:[#allocation1] sm:$0xff pattern:$0x73625140] %v1865
  %s1897 = scalar_lea.vmem [#allocation1], 3
  %v1898 = vld [vmem:[%s1897] ss:$4 sm:$0xff]
  %1900 = vst [vmem:[%s25 + $0xe] sm:$0x3] %v1898
  // Predicated region
  $region102: #{forward.1} parent=0 // pred_check
    _
  $region103: #{forward.1} parent=0 // pred_check_branch
    %1902 = sbr.rel (0) target = $region105
  $region104: #{forward.1} parent=0 // pred_region
    _
  $region105: #{forward.1} parent=0 // pred_fallthru
    _
  // Predicated region
  $region106: #{forward.1} parent=0 // pred_check
    _
  $region107: #{forward.1} parent=0 // pred_check_branch
    %1904 = sbr.rel (0) target = $region109
  $region108: #{forward.1} parent=0 // pred_region
    _
  $region109: #{forward.1} parent=0 // pred_fallthru
    _

</llo_original>
